<compile_context>
chip_gen: v5e
topology: v5e:2x2
jax: 0.10.0
libtpu: 0.0.40
codegen_flags: <defaults>
</compile_context>

<pallas_src>
import jax
import jax.numpy as jnp
from jax.experimental import pallas as pl
from jax.experimental.pallas import tpu as pltpu

BN_EPS = 9.99999974738e-06
C_IN, C_MID, C_OUT = 128, 32, 704

MATMUL_BF16 = True                       # bf16 operands for the big matmul (perf review)
H_DTYPE = jnp.bfloat16 if MATMUL_BF16 else jnp.float32

TILE_HW_MAX = 2048                       # lane tile cap for large H*W (multiple of 128)
FULL_HW_MAX = 4096                       # up to here: one full-extent tile, no padding
VMEM_LIMIT = 32 * 1024 * 1024            # worst working set ~24 MiB (hw=4096 full path)


def _round_up(v, m):
    return (v + m - 1) // m * m


def _pick_tiling(hw):
    """Returns (tile_hw, hw_pad). Avoids output padding except for the rare
    large-and-not-multiple-of-128 case."""
    if hw <= FULL_HW_MAX:
        return hw, hw                    # full-extent blocks, grid only over N
    if hw % 128 == 0:
        d = TILE_HW_MAX
        while hw % d != 0:
            d -= 128                     # always terminates at 128
        return d, hw
    # TODO(synk): rare fallback (large H*W not a multiple of 128) still pays a
    # depad copy in the wrapper.
    return TILE_HW_MAX, _round_up(hw, TILE_HW_MAX)


# ---------------- phase 1: h0 = conv1(x) (no bias), cache h0 + batch stats ---
def _stats_kernel(x_ref, w1_ref, h_ref, sum_ref, sq_ref):
    # x_ref: (128, T)  w1_ref: (32, 128)
    # h_ref: (32, T) bf16/f32 cache; sum_ref / sq_ref: (32, 1) per-n accumulators
    t = pl.program_id(1)

    @pl.when(t == 0)
    def _init():
        sum_ref[...] = jnp.zeros_like(sum_ref)
        sq_ref[...] = jnp.zeros_like(sq_ref)

    h = jnp.dot(w1_ref[...], x_ref[...], preferred_element_type=jnp.float32)
    h_ref[...] = h.astype(h_ref.dtype)
    # No padding mask needed: zero-padded x lanes give exactly h == 0 (no bias),
    # contributing 0 to both sums.
    sum_ref[...] += jnp.sum(h, axis=1, keepdims=True)
    sq_ref[...] += jnp.sum(h * h, axis=1, keepdims=True)


# ---------------- phase 2: BN scale/shift -> ReLU -> conv2 -------------------
def _apply_kernel(h_ref, scale_ref, shift_ref, w2_ref, b2_ref, o_ref):
    # h_ref: (32, T)  scale/shift: (32, 1)  w2_ref: (704, 32)  o_ref: (704, T)
    h = h_ref[...].astype(jnp.float32)
    h = jnp.maximum(h * scale_ref[...] + shift_ref[...], 0.0)
    o_ref[...] = (
        jnp.dot(w2_ref[...], h.astype(w2_ref.dtype),
                preferred_element_type=jnp.float32)
        + b2_ref[...]
    )


def module1562_forward(x_nchw, params):
    """x_nchw: (N, 128, H, W) f32. Returns (N, 704*H*W) matching torch Flatten(1)."""
    w1, b1, gamma, beta, w2, b2 = params
    del b1  # conv1 bias cancels exactly under train-mode (batch-stat) BatchNorm
    N, C, H, W = x_nchw.shape
    assert C == C_IN
    hw = H * W

    tile_hw, hw_pad = _pick_tiling(hw)
    n_tiles = hw_pad // tile_hw

    # NCHW -> (N, C, H*W): free reshape; channels-first math needs no transpose.
    x3 = x_nchw.reshape(N, C_IN, hw)
    if hw_pad != hw:
        x3 = jnp.pad(x3, ((0, 0), (0, 0), (0, hw_pad - hw)))

    # --- phase 1: cache h0 and per-n channel statistics ----------------------
    h_cache, sum_n, sq_n = pl.pallas_call(
        _stats_kernel,
        grid=(N, n_tiles),
        in_specs=[
            pl.BlockSpec((None, C_IN, tile_hw), lambda n, t: (n, 0, t)),
            pl.BlockSpec((C_MID, C_IN), lambda n, t: (0, 0)),
        ],
        out_specs=(
            pl.BlockSpec((None, C_MID, tile_hw), lambda n, t: (n, 0, t)),
            pl.BlockSpec((None, C_MID, 1), lambda n, t: (n, 0, 0)),
            pl.BlockSpec((None, C_MID, 1), lambda n, t: (n, 0, 0)),
        ),
        out_shape=(
            jax.ShapeDtypeStruct((N, C_MID, hw_pad), H_DTYPE),
            jax.ShapeDtypeStruct((N, C_MID, 1), jnp.float32),
            jax.ShapeDtypeStruct((N, C_MID, 1), jnp.float32),
        ),
        compiler_params=pltpu.CompilerParams(
            dimension_semantics=("parallel", "arbitrary"),
            vmem_limit_bytes=VMEM_LIMIT,
        ),
    )(x3, w1)

    # --- fold BatchNorm (train-mode batch stats) into a per-channel affine ---
    p_total = N * hw
    sum_h = jnp.sum(sum_n, axis=0)                       # (32, 1)
    sq_h = jnp.sum(sq_n, axis=0)                         # (32, 1)
    mean = sum_h / p_total
    var = jnp.maximum(sq_h / p_total - mean * mean, 0.0)
    scale = gamma.reshape(C_MID, 1) * jax.lax.rsqrt(var + BN_EPS)
    shift = beta.reshape(C_MID, 1) - mean * scale

    # --- phase 2: BN affine -> ReLU -> conv2, output in NCHW order -----------
    out3 = pl.pallas_call(
        _apply_kernel,
        grid=(N, n_tiles),
        in_specs=[
            pl.BlockSpec((None, C_MID, tile_hw), lambda n, t: (n, 0, t)),
            pl.BlockSpec((C_MID, 1), lambda n, t: (0, 0)),
            pl.BlockSpec((C_MID, 1), lambda n, t: (0, 0)),
            pl.BlockSpec((C_OUT, C_MID), lambda n, t: (0, 0)),
            pl.BlockSpec((C_OUT, 1), lambda n, t: (0, 0)),
        ],
        out_specs=pl.BlockSpec((None, C_OUT, tile_hw), lambda n, t: (n, 0, t)),
        out_shape=jax.ShapeDtypeStruct((N, C_OUT, hw_pad), jnp.float32),
        compiler_params=pltpu.CompilerParams(
            dimension_semantics=("parallel", "parallel"),
            vmem_limit_bytes=VMEM_LIMIT,
        ),
    )(h_cache, scale, shift, w2.astype(H_DTYPE), b2.reshape(C_OUT, 1))

    if hw_pad != hw:                      # only on the rare fallback path
        out3 = out3[:, :, :hw]
    return out3.reshape(N, C_OUT * hw)    # == Flatten(1) of the NCHW result


def _reference_forward(x_nchw, params):
    # Pure-JAX f32 reference (mirrors the torch module; high-precision matmuls).
    w1, b1, gamma, beta, w2, b2 = params
    N, C, H, W = x_nchw.shape
    x3 = x_nchw.reshape(N, C, H * W)
    h = jnp.einsum("oc,ncp->nop", w1, x3, precision="highest") + b1[None, :, None]
    mean = jnp.mean(h, axis=(0, 2), keepdims=True)
    var = jnp.mean((h - mean) ** 2, axis=(0, 2), keepdims=True)
    h = (h - mean) * jax.lax.rsqrt(var + BN_EPS)
    h = h * gamma[None, :, None] + beta[None, :, None]
    h = jnp.maximum(h, 0.0)
    o = jnp.einsum("oc,ncp->nop", w2, h, precision="highest") + b2[None, :, None]
    return o.reshape(N, -1)


def init_params(key):
    k1, k2, k3, k4 = jax.random.split(key, 4)
    # conv1: PyTorch weight (32,128,1,1) -> (32,128); bias (32,)
    lim1 = 1.0 / (128.0 ** 0.5)
    w1 = jax.random.uniform(k1, (C_MID, C_IN), jnp.float32, -lim1, lim1)
    b1 = jax.random.uniform(k2, (C_MID,), jnp.float32, -lim1, lim1)
    # BatchNorm affine params (default init: gamma=1, beta=0)
    gamma = jnp.ones((C_MID,), jnp.float32)
    beta = jnp.zeros((C_MID,), jnp.float32)
    # conv2: PyTorch weight (704,32,1,1) -> (704,32); bias (704,)
    lim2 = 1.0 / (32.0 ** 0.5)
    w2 = jax.random.uniform(k3, (C_OUT, C_MID), jnp.float32, -lim2, lim2)
    b2 = jax.random.uniform(k4, (C_OUT,), jnp.float32, -lim2, lim2)
    return (w1, b1, gamma, beta, w2, b2)


if __name__ == "__main__":
    key = jax.random.PRNGKey(0)
    pkey, *xkeys = jax.random.split(key, 5)
    params = init_params(pkey)
    fwd = jax.jit(module1562_forward)

    # Tolerance: bf16 MXU operands (perf-review recommendation) bound accuracy
    # to ~bf16 level; with MATMUL_BF16=False the kernel matches f32 at 1e-3.
    tol = 2e-2 if MATMUL_BF16 else 1e-3

    cases = [
        (2, 128, 16, 16),   # hw=256: full-extent tile path, grid (N, 1)
        (2, 128, 10, 10),   # hw=100: full-extent tile path, hw not mult of 128
        (1, 128, 80, 80),   # hw=6400: divisor-tiled path (tile=1280, 5 tiles)
        (1, 128, 72, 72),   # hw=5184: rare fallback pad/depad path (tile=2048)
    ]
    for idx, shape in enumerate(cases):
        x = jax.random.normal(xkeys[idx % len(xkeys)], shape, jnp.float32)
        out = jax.block_until_ready(fwd(x, params))
        ref = _reference_forward(x, params)
        n, _, h, w = shape
        assert out.shape == (n, C_OUT * h * w), (out.shape, shape)
        assert jnp.allclose(out, ref, atol=tol, rtol=tol), f"mismatch on case {shape}"

    print("KERNEL_OK")
</pallas_src>

<mosaic_0001>
module attributes {stable_mosaic.version = 11 : i64} {
  func.func @_stats_kernel(%arg0: i32, %arg1: i32, %arg2: memref<1x128x256xf32, #tpu.memory_space<vmem>>, %arg3: memref<32x128xf32, #tpu.memory_space<vmem>>, %arg4: memref<1x32x256xbf16, #tpu.memory_space<vmem>>, %arg5: memref<1x32x1xf32, #tpu.memory_space<vmem>>, %arg6: memref<1x32x1xf32, #tpu.memory_space<vmem>>) attributes {dimension_semantics = [#tpu.dimension_semantics<parallel>, #tpu.dimension_semantics<arbitrary>], iteration_bounds = array<i64: 2, 1>, scalar_prefetch = 0 : i64, scratch_operands = 0 : i64, tpu.core_type = #tpu.core_type<tc>, window_params = [{transform_indices = @transform_0, window_bounds = array<i64: 1, 128, 256>}, {pipeline_mode = #tpu.pipeline_mode<synchronous>, transform_indices = @transform_1, window_bounds = array<i64: 32, 128>}, {transform_indices = @transform_2, window_bounds = array<i64: 1, 32, 256>}, {transform_indices = @transform_3, window_bounds = array<i64: 1, 32, 1>}, {transform_indices = @transform_4, window_bounds = array<i64: 1, 32, 1>}]} {
    %c0_i32 = arith.constant 0 : i32
    %0 = arith.cmpi eq, %arg1, %c0_i32 : i32
    %1 = arith.extui %0 : i1 to i32
    %c0_i32_0 = arith.constant 0 : i32
    %2 = arith.cmpi ne, %1, %c0_i32_0 : i32
    scf.if %2 {
      %cst_22 = arith.constant 0.000000e+00 : f32
      %28 = vector.broadcast %cst_22 : f32 to vector<32x1xf32>
      %c0_23 = arith.constant 0 : index
      %c0_24 = arith.constant 0 : index
      %c0_25 = arith.constant 0 : index
      %29 = vector.load %arg5[%c0_23, %c0_24, %c0_25] : memref<1x32x1xf32, #tpu.memory_space<vmem>>, vector<1x32x1xf32>
      %30 = vector.shape_cast %29 : vector<1x32x1xf32> to vector<32x1xf32>
      %31 = vector.shape_cast %28 : vector<32x1xf32> to vector<1x32x1xf32>
      tpu.vector_store %arg5[%c0_23, %c0_24, %c0_25], %31 {strides = array<i32>} : memref<1x32x1xf32, #tpu.memory_space<vmem>>, vector<1x32x1xf32>,
      %cst_26 = arith.constant 0.000000e+00 : f32
      %32 = vector.broadcast %cst_26 : f32 to vector<32x1xf32>
      %c0_27 = arith.constant 0 : index
      %c0_28 = arith.constant 0 : index
      %c0_29 = arith.constant 0 : index
      %33 = vector.load %arg6[%c0_27, %c0_28, %c0_29] : memref<1x32x1xf32, #tpu.memory_space<vmem>>, vector<1x32x1xf32>
      %34 = vector.shape_cast %33 : vector<1x32x1xf32> to vector<32x1xf32>
      %35 = vector.shape_cast %32 : vector<32x1xf32> to vector<1x32x1xf32>
      tpu.vector_store %arg6[%c0_27, %c0_28, %c0_29], %35 {strides = array<i32>} : memref<1x32x1xf32, #tpu.memory_space<vmem>>, vector<1x32x1xf32>,
    } else {
    }
    %c0 = arith.constant 0 : index
    %c0_1 = arith.constant 0 : index
    %3 = vector.load %arg3[%c0, %c0_1] : memref<32x128xf32, #tpu.memory_space<vmem>>, vector<32x128xf32>
    %c0_2 = arith.constant 0 : index
    %c0_3 = arith.constant 0 : index
    %c0_4 = arith.constant 0 : index
    %4 = vector.load %arg2[%c0_2, %c0_3, %c0_4] : memref<1x128x256xf32, #tpu.memory_space<vmem>>, vector<1x128x256xf32>
    %5 = vector.shape_cast %4 : vector<1x128x256xf32> to vector<128x256xf32>
    %cst = arith.constant dense<0.000000e+00> : vector<32x256xf32>
    %6 = tpu.matmul %3, %5, %cst {dimension_numbers = #tpu.dot_dimension_numbers<[1], [0], [0], [1], [0, 0, 1, 1], [], []>} : vector<32x128xf32>, vector<128x256xf32>, vector<32x256xf32> -> vector<32x256xf32>
    %7 = arith.truncf %6 : vector<32x256xf32> to vector<32x256xbf16>
    %c0_5 = arith.constant 0 : index
    %c0_6 = arith.constant 0 : index
    %c0_7 = arith.constant 0 : index
    %8 = vector.load %arg4[%c0_5, %c0_6, %c0_7] : memref<1x32x256xbf16, #tpu.memory_space<vmem>>, vector<1x32x256xbf16>
    %9 = vector.shape_cast %8 : vector<1x32x256xbf16> to vector<32x256xbf16>
    %10 = vector.shape_cast %7 : vector<32x256xbf16> to vector<1x32x256xbf16>
    tpu.vector_store %arg4[%c0_5, %c0_6, %c0_7], %10 {strides = array<i32>} : memref<1x32x256xbf16, #tpu.memory_space<vmem>>, vector<1x32x256xbf16>,
    %c0_8 = arith.constant 0 : index
    %c0_9 = arith.constant 0 : index
    %c0_10 = arith.constant 0 : index
    %11 = vector.load %arg5[%c0_8, %c0_9, %c0_10] : memref<1x32x1xf32, #tpu.memory_space<vmem>>, vector<1x32x1xf32>
    %12 = vector.shape_cast %11 : vector<1x32x1xf32> to vector<32x1xf32>
    %cst_11 = arith.constant dense<0.000000e+00> : vector<32xf32>
    %13 = vector.multi_reduction <add>, %6, %cst_11 [1] : vector<32x256xf32> to vector<32xf32>
    %14 = vector.shape_cast %13 : vector<32xf32> to vector<32x1xf32>
    %15 = arith.addf %12, %14 : vector<32x1xf32>
    %c0_12 = arith.constant 0 : index
    %c0_13 = arith.constant 0 : index
    %c0_14 = arith.constant 0 : index
    %16 = vector.load %arg5[%c0_12, %c0_13, %c0_14] : memref<1x32x1xf32, #tpu.memory_space<vmem>>, vector<1x32x1xf32>
    %17 = vector.shape_cast %16 : vector<1x32x1xf32> to vector<32x1xf32>
    %18 = vector.shape_cast %15 : vector<32x1xf32> to vector<1x32x1xf32>
    tpu.vector_store %arg5[%c0_12, %c0_13, %c0_14], %18 {strides = array<i32>} : memref<1x32x1xf32, #tpu.memory_space<vmem>>, vector<1x32x1xf32>,
    %c0_15 = arith.constant 0 : index
    %c0_16 = arith.constant 0 : index
    %c0_17 = arith.constant 0 : index
    %19 = vector.load %arg6[%c0_15, %c0_16, %c0_17] : memref<1x32x1xf32, #tpu.memory_space<vmem>>, vector<1x32x1xf32>
    %20 = vector.shape_cast %19 : vector<1x32x1xf32> to vector<32x1xf32>
    %21 = arith.mulf %6, %6 : vector<32x256xf32>
    %cst_18 = arith.constant dense<0.000000e+00> : vector<32xf32>
    %22 = vector.multi_reduction <add>, %21, %cst_18 [1] : vector<32x256xf32> to vector<32xf32>
    %23 = vector.shape_cast %22 : vector<32xf32> to vector<32x1xf32>
    %24 = arith.addf %20, %23 : vector<32x1xf32>
    %c0_19 = arith.constant 0 : index
    %c0_20 = arith.constant 0 : index
    %c0_21 = arith.constant 0 : index
    %25 = vector.load %arg6[%c0_19, %c0_20, %c0_21] : memref<1x32x1xf32, #tpu.memory_space<vmem>>, vector<1x32x1xf32>
    %26 = vector.shape_cast %25 : vector<1x32x1xf32> to vector<32x1xf32>
    %27 = vector.shape_cast %24 : vector<32x1xf32> to vector<1x32x1xf32>
    tpu.vector_store %arg6[%c0_19, %c0_20, %c0_21], %27 {strides = array<i32>} : memref<1x32x1xf32, #tpu.memory_space<vmem>>, vector<1x32x1xf32>,
    return
  }
  func.func @transform_0(%arg0: i32, %arg1: i32) -> (i32, i32, i32) {
    %c0_i32 = arith.constant 0 : i32
    %c0_i32_0 = arith.constant 0 : i32
    return %arg0, %c0_i32, %arg1 : i32, i32, i32
  }
  func.func @transform_1(%arg0: i32, %arg1: i32) -> (i32, i32) {
    %c0_i32 = arith.constant 0 : i32
    %c0_i32_0 = arith.constant 0 : i32
    %c0_i32_1 = arith.constant 0 : i32
    return %c0_i32, %c0_i32_0 : i32, i32
  }
  func.func @transform_2(%arg0: i32, %arg1: i32) -> (i32, i32, i32) {
    %c0_i32 = arith.constant 0 : i32
    %c0_i32_0 = arith.constant 0 : i32
    return %arg0, %c0_i32, %arg1 : i32, i32, i32
  }
  func.func @transform_3(%arg0: i32, %arg1: i32) -> (i32, i32, i32) {
    %c0_i32 = arith.constant 0 : i32
    %c0_i32_0 = arith.constant 0 : i32
    %c0_i32_1 = arith.constant 0 : i32
    return %arg0, %c0_i32, %c0_i32_0 : i32, i32, i32
  }
  func.func @transform_4(%arg0: i32, %arg1: i32) -> (i32, i32, i32) {
    %c0_i32 = arith.constant 0 : i32
    %c0_i32_0 = arith.constant 0 : i32
    %c0_i32_1 = arith.constant 0 : i32
    return %arg0, %c0_i32, %c0_i32_0 : i32, i32, i32
  }
}

module attributes {stable_mosaic.version = 11 : i64} {
  func.func @_apply_kernel(%arg0: i32, %arg1: i32, %arg2: memref<1x32x256xbf16, #tpu.memory_space<vmem>>, %arg3: memref<32x1xf32, #tpu.memory_space<vmem>>, %arg4: memref<32x1xf32, #tpu.memory_space<vmem>>, %arg5: memref<704x32xbf16, #tpu.memory_space<vmem>>, %arg6: memref<704x1xf32, #tpu.memory_space<vmem>>, %arg7: memref<1x704x256xf32, #tpu.memory_space<vmem>>) attributes {dimension_semantics = [#tpu.dimension_semantics<parallel>, #tpu.dimension_semantics<parallel>], iteration_bounds = array<i64: 2, 1>, scalar_prefetch = 0 : i64, scratch_operands = 0 : i64, tpu.core_type = #tpu.core_type<tc>, window_params = [{transform_indices = @transform_0, window_bounds = array<i64: 1, 32, 256>}, {pipeline_mode = #tpu.pipeline_mode<synchronous>, transform_indices = @transform_1, window_bounds = array<i64: 32, 1>}, {pipeline_mode = #tpu.pipeline_mode<synchronous>, transform_indices = @transform_2, window_bounds = array<i64: 32, 1>}, {pipeline_mode = #tpu.pipeline_mode<synchronous>, transform_indices = @transform_3, window_bounds = array<i64: 704, 32>}, {pipeline_mode = #tpu.pipeline_mode<synchronous>, transform_indices = @transform_4, window_bounds = array<i64: 704, 1>}, {transform_indices = @transform_5, window_bounds = array<i64: 1, 704, 256>}]} {
    %c0 = arith.constant 0 : index
    %c0_0 = arith.constant 0 : index
    %c0_1 = arith.constant 0 : index
    %0 = vector.load %arg2[%c0, %c0_0, %c0_1] : memref<1x32x256xbf16, #tpu.memory_space<vmem>>, vector<1x32x256xbf16>
    %1 = vector.shape_cast %0 : vector<1x32x256xbf16> to vector<32x256xbf16>
    %2 = arith.extf %1 : vector<32x256xbf16> to vector<32x256xf32>
    %c0_2 = arith.constant 0 : index
    %c0_3 = arith.constant 0 : index
    %3 = vector.load %arg3[%c0_2, %c0_3] : memref<32x1xf32, #tpu.memory_space<vmem>>, vector<32x1xf32>
    %4 = vector.broadcast %3 : vector<32x1xf32> to vector<32x256xf32>
    %5 = arith.mulf %2, %4 : vector<32x256xf32>
    %c0_4 = arith.constant 0 : index
    %c0_5 = arith.constant 0 : index
    %6 = vector.load %arg4[%c0_4, %c0_5] : memref<32x1xf32, #tpu.memory_space<vmem>>, vector<32x1xf32>
    %7 = vector.broadcast %6 : vector<32x1xf32> to vector<32x256xf32>
    %8 = arith.addf %5, %7 : vector<32x256xf32>
    %cst = arith.constant 0.000000e+00 : f32
    %9 = vector.broadcast %cst : f32 to vector<32x256xf32>
    %10 = arith.maximumf %8, %9 : vector<32x256xf32>
    %c0_6 = arith.constant 0 : index
    %c0_7 = arith.constant 0 : index
    %11 = vector.load %arg5[%c0_6, %c0_7] : memref<704x32xbf16, #tpu.memory_space<vmem>>, vector<704x32xbf16>
    %12 = arith.truncf %10 : vector<32x256xf32> to vector<32x256xbf16>
    %cst_8 = arith.constant dense<0.000000e+00> : vector<704x256xf32>
    %13 = tpu.matmul %11, %12, %cst_8 {dimension_numbers = #tpu.dot_dimension_numbers<[1], [0], [0], [1], [0, 0, 1, 1], [], []>} : vector<704x32xbf16>, vector<32x256xbf16>, vector<704x256xf32> -> vector<704x256xf32>
    %c0_9 = arith.constant 0 : index
    %c0_10 = arith.constant 0 : index
    %14 = vector.load %arg6[%c0_9, %c0_10] : memref<704x1xf32, #tpu.memory_space<vmem>>, vector<704x1xf32>
    %15 = vector.broadcast %14 : vector<704x1xf32> to vector<704x256xf32>
    %16 = arith.addf %13, %15 : vector<704x256xf32>
    %c0_11 = arith.constant 0 : index
    %c0_12 = arith.constant 0 : index
    %c0_13 = arith.constant 0 : index
    %17 = vector.load %arg7[%c0_11, %c0_12, %c0_13] : memref<1x704x256xf32, #tpu.memory_space<vmem>>, vector<1x704x256xf32>
    %18 = vector.shape_cast %17 : vector<1x704x256xf32> to vector<704x256xf32>
    %19 = vector.shape_cast %16 : vector<704x256xf32> to vector<1x704x256xf32>
    tpu.vector_store %arg7[%c0_11, %c0_12, %c0_13], %19 {strides = array<i32>} : memref<1x704x256xf32, #tpu.memory_space<vmem>>, vector<1x704x256xf32>,
    return
  }
  func.func @transform_0(%arg0: i32, %arg1: i32) -> (i32, i32, i32) {
    %c0_i32 = arith.constant 0 : i32
    %c0_i32_0 = arith.constant 0 : i32
    return %arg0, %c0_i32, %arg1 : i32, i32, i32
  }
  func.func @transform_1(%arg0: i32, %arg1: i32) -> (i32, i32) {
    %c0_i32 = arith.constant 0 : i32
    %c0_i32_0 = arith.constant 0 : i32
    %c0_i32_1 = arith.constant 0 : i32
    return %c0_i32, %c0_i32_0 : i32, i32
  }
  func.func @transform_2(%arg0: i32, %arg1: i32) -> (i32, i32) {
    %c0_i32 = arith.constant 0 : i32
    %c0_i32_0 = arith.constant 0 : i32
    %c0_i32_1 = arith.constant 0 : i32
    return %c0_i32, %c0_i32_0 : i32, i32
  }
  func.func @transform_3(%arg0: i32, %arg1: i32) -> (i32, i32) {
    %c0_i32 = arith.constant 0 : i32
    %c0_i32_0 = arith.constant 0 : i32
    %c0_i32_1 = arith.constant 0 : i32
    return %c0_i32, %c0_i32_0 : i32, i32
  }
  func.func @transform_4(%arg0: i32, %arg1: i32) -> (i32, i32) {
    %c0_i32 = arith.constant 0 : i32
    %c0_i32_0 = arith.constant 0 : i32
    %c0_i32_1 = arith.constant 0 : i32
    return %c0_i32, %c0_i32_0 : i32, i32
  }
  func.func @transform_5(%arg0: i32, %arg1: i32) -> (i32, i32, i32) {
    %c0_i32 = arith.constant 0 : i32
    %c0_i32_0 = arith.constant 0 : i32
    return %arg0, %c0_i32, %arg1 : i32, i32, i32
  }
}

</mosaic_0001>

<llo_original>
// kernel: module1562_forward.2
$region0: #{module1562_forward.2}
  #allocation0 [shape = 'u32[]', space=smem, size = 0x4, offset = 0x4, fixed_abs, tag = 'smem constant byte address 0x4 - core index']
  #allocation1 [shape = 'u32[72,128]{1,0:T(1,128)}', space=vmem, size = 0x9000, scoped, tag = 'internal scratch']
  %s0 = inlined_call_operand.vmem [shape: f32[2,128,256], index: 0, kind: input, shape index: {}]
  %s1 = inlined_call_operand.hbm [shape: f32[32,128], index: 1, kind: input, shape index: {}]
  %s2 = inlined_call_operand.vmem [shape: bf16[2,32,256], index: 2, kind: output, shape index: {0}]
  %s3 = inlined_call_operand.vmem [shape: f32[2,32,1], index: 3, kind: output, shape index: {1}]
  %s4 = inlined_call_operand.vmem [shape: f32[2,32,1], index: 4, kind: output, shape index: {2}]
  %5 = xla_tuple %s2, %s3, %s4
  %s6 = sld [smem:[#allocation0]]
  $region65: #{module1562_forward.2} parent=0
    _
  %s8 = ssub.s32 1, %s6
  %s9 = scalar_select 0, %s8, %s6
  $region1: #{module1562_forward.2} parent=0
    #allocation2 [shape = 'u8[16384]{0}', space=vmem, size = 0x4000, scoped, tag = 'input window, operand 1, single buffered']
    #allocation3 [shape = 's32[2]{0}', space=sflag, size = 0x8, scoped, tag = 'scoped memory for module1562_forward.2']
    %10 = vsyncpa [#allocation3], 0
    loop: start=0, step=1, limit=4
    $region2: #{module1562_forward.2} parent=1 // loop_pre_header
      _
    $region3: #{module1562_forward.2} parent=1 // loop_header
      %s12 = sphi 0, %s16
      %p13 = scmp.ge.s32.totalorder %s12, 4
      %s19 = sphi 0, %s31
      %s20 = sphi 0, %s27
      %s21 = sphi 0, %s19
      %s22 = sphi 0, %s20
      %s23 = sphi 0, %s21
      %s24 = sphi 0, %s22
      %s36 = sphi 0, %s38
      %s39 = sphi 0, %s36
      %s40 = sphi 0, %s39
      %s56 = sphi 0, %s40
      %s60 = sphi 0, %s60
      %s62 = sphi 0, %s60
      %s63 = sphi 0, %s62
      %s77 = sphi 0, %s63
      %s85 = sphi 0, %s87
      %s88 = sphi 0, %s85
      %s89 = sphi 0, %s88
      %s105 = sphi 0, %s89
      %s111 = sphi 0, %s113
      %s114 = sphi 0, %s111
      %s115 = sphi 0, %s114
      %s131 = sphi 0, %s115
      %s137 = sphi 0, %s139
      %s140 = sphi 0, %s137
      %s141 = sphi 0, %s140
      %s157 = sphi 0, %s141
    $region4: #{module1562_forward.2} parent=1 // loop_header_branch
      %15 = sbr.rel (%p13) target = $region8
    $region5: #{module1562_forward.2} parent=1 // loop_body
      %s17 = ssub.s32 %s12, 1
      %s18 = ssub.s32 %s12, 2
      %s25 = sadd.s32 1, %s20
      %p26 = scmp.ge.s32.totalorder %s25, 1
      %s27 = scalar_select %p26, 0, %s25
      %s28 = sadd.s32 1, %s19
      %s29 = scalar_select %p26, %s28, %s19
      %p30 = scmp.ge.s32.totalorder %s29, 2
      %s31 = scalar_select %p30, 0, %s29
      %s32 = ssub.s32 %s19, %s31
      %s33 = ssub.s32 %s20, %s27
      %s34 = sor.u32 %s32, %s33
      %p35 = scmp.eq.s32.totalorder %s34, 0
      %s37 = sadd.s32 %s36, 1
      %s38 = scalar_select %p35, %s36, %s37
      %p41 = pneg %p35
      %p42 = scmp.eq.s32.totalorder %s12, 1
      %p43 = por %p41, %p42
      %p44 = scmp.ne.s32.totalorder %s36, %s39
      %p45 = scmp.eq.s32.totalorder %s12, 0
      %p46 = por %p44, %p45
      %p47 = scmp.ne.s32.totalorder %s36, %s39
      %p48 = scmp.eq.s32.totalorder %s17, 1
      %p49 = por %p47, %p48
      %p50 = scmp.ne.s32.totalorder %s39, %s40
      %p51 = scmp.eq.s32.totalorder %s17, 0
      %p52 = por %p50, %p51
      %p53 = scmp.ne.s32.totalorder %s39, %s40
      %p54 = scmp.eq.s32.totalorder %s18, 1
      %p55 = por %p53, %p54
      %p57 = scmp.ne.s32.totalorder %s40, %s56
      %p58 = scmp.eq.s32.totalorder %s18, 0
      %p59 = por %p57, %p58
      %s61 = sadd.s32 %s60, 1
      %p64 = scmp.eq.s32.totalorder %s12, 1
      %p65 = scmp.ne.s32.totalorder %s60, %s62
      %p66 = scmp.eq.s32.totalorder %s12, 0
      %p67 = por %p65, %p66
      %p68 = scmp.ne.s32.totalorder %s60, %s62
      %p69 = scmp.eq.s32.totalorder %s17, 1
      %p70 = por %p68, %p69
      %p71 = scmp.ne.s32.totalorder %s62, %s63
      %p72 = scmp.eq.s32.totalorder %s17, 0
      %p73 = por %p71, %p72
      %p74 = scmp.ne.s32.totalorder %s62, %s63
      %p75 = scmp.eq.s32.totalorder %s18, 1
      %p76 = por %p74, %p75
      %p78 = scmp.ne.s32.totalorder %s63, %s77
      %p79 = scmp.eq.s32.totalorder %s18, 0
      %p80 = por %p78, %p79
      %s81 = ssub.s32 %s19, %s31
      %s82 = ssub.s32 %s20, %s27
      %s83 = sor.u32 %s81, %s82
      %p84 = scmp.eq.s32.totalorder %s83, 0
      %s86 = sadd.s32 %s85, 1
      %s87 = scalar_select %p84, %s85, %s86
      %p90 = pneg %p84
      %p91 = scmp.eq.s32.totalorder %s12, 1
      %p92 = por %p90, %p91
      %p93 = scmp.ne.s32.totalorder %s85, %s88
      %p94 = scmp.eq.s32.totalorder %s12, 0
      %p95 = por %p93, %p94
      %p96 = scmp.ne.s32.totalorder %s85, %s88
      %p97 = scmp.eq.s32.totalorder %s17, 1
      %p98 = por %p96, %p97
      %p99 = scmp.ne.s32.totalorder %s88, %s89
      %p100 = scmp.eq.s32.totalorder %s17, 0
      %p101 = por %p99, %p100
      %p102 = scmp.ne.s32.totalorder %s88, %s89
      %p103 = scmp.eq.s32.totalorder %s18, 1
      %p104 = por %p102, %p103
      %p106 = scmp.ne.s32.totalorder %s89, %s105
      %p107 = scmp.eq.s32.totalorder %s18, 0
      %p108 = por %p106, %p107
      %s109 = ssub.s32 %s19, %s31
      %p110 = scmp.eq.s32.totalorder %s109, 0
      %s112 = sadd.s32 %s111, 1
      %s113 = scalar_select %p110, %s111, %s112
      %p116 = pneg %p110
      %p117 = scmp.eq.s32.totalorder %s12, 1
      %p118 = por %p116, %p117
      %p119 = scmp.ne.s32.totalorder %s111, %s114
      %p120 = scmp.eq.s32.totalorder %s12, 0
      %p121 = por %p119, %p120
      %p122 = scmp.ne.s32.totalorder %s111, %s114
      %p123 = scmp.eq.s32.totalorder %s17, 1
      %p124 = por %p122, %p123
      %p125 = scmp.ne.s32.totalorder %s114, %s115
      %p126 = scmp.eq.s32.totalorder %s17, 0
      %p127 = por %p125, %p126
      %p128 = scmp.ne.s32.totalorder %s114, %s115
      %p129 = scmp.eq.s32.totalorder %s18, 1
      %p130 = por %p128, %p129
      %p132 = scmp.ne.s32.totalorder %s115, %s131
      %p133 = scmp.eq.s32.totalorder %s18, 0
      %p134 = por %p132, %p133
      %s135 = ssub.s32 %s19, %s31
      %p136 = scmp.eq.s32.totalorder %s135, 0
      %s138 = sadd.s32 %s137, 1
      %s139 = scalar_select %p136, %s137, %s138
      %p142 = pneg %p136
      %p143 = scmp.eq.s32.totalorder %s12, 1
      %p144 = por %p142, %p143
      %p145 = scmp.ne.s32.totalorder %s137, %s140
      %p146 = scmp.eq.s32.totalorder %s12, 0
      %p147 = por %p145, %p146
      %p148 = scmp.ne.s32.totalorder %s137, %s140
      %p149 = scmp.eq.s32.totalorder %s17, 1
      %p150 = por %p148, %p149
      %p151 = scmp.ne.s32.totalorder %s140, %s141
      %p152 = scmp.eq.s32.totalorder %s17, 0
      %p153 = por %p151, %p152
      %p154 = scmp.ne.s32.totalorder %s140, %s141
      %p155 = scmp.eq.s32.totalorder %s18, 1
      %p156 = por %p154, %p155
      %p158 = scmp.ne.s32.totalorder %s141, %s157
      %p159 = scmp.eq.s32.totalorder %s18, 0
      %p160 = por %p158, %p159
      %p161 = scmp.le.s32.totalorder 1, %s12
      %p162 = scmp.lt.s32.totalorder %s12, 3
      %p163 = pnand %p161, %p162
      %p164 = pneg %p163
      // Predicated region
      $region9: #{module1562_forward.2} parent=5 // pred_check
        _
      $region10: #{module1562_forward.2} parent=5 // pred_check_branch
        %166 = sbr.rel (%p163) target = $region12
      $region11: #{module1562_forward.2} parent=5 // pred_region
        %s167 = ssub.s32 %s12, 1
        // Predicated region
        $region13: #{module1562_forward.2} parent=11 // pred_check
          %p168 = pneg %p73
        $region14: #{module1562_forward.2} parent=11 // pred_check_branch
          %170 = sbr.rel (%p168) target = $region16
        $region15: #{module1562_forward.2} parent=11 // pred_region
          %172 = vsyncadd [#allocation3], 0
          %s173 = sshll.u32 %s1, 4
          %s174 = int_to_ptr.hbm [resolvable:$true] %s173
          %s175 = sshll.u32 [#allocation2], 4
          %s176 = int_to_ptr.vmem [resolvable:$true] %s175
          %181 = dma.hbm_to_vmem [thread:$0]  %s174, 512, %s176, [#allocation3], 128, 128, 8
        $region16: #{module1562_forward.2} parent=11 // pred_fallthru
          _
      $region12: #{module1562_forward.2} parent=5 // pred_fallthru
        _
      %p182 = scmp.lt.s32.totalorder %s12, 2
      // Predicated region
      $region17: #{module1562_forward.2} parent=5 // pred_check
        %p183 = pneg %p182
      $region18: #{module1562_forward.2} parent=5 // pred_check_branch
        %185 = sbr.rel (%p183) target = $region20
      $region19: #{module1562_forward.2} parent=5 // pred_region
        // Predicated region
        $region21: #{module1562_forward.2} parent=19 // pred_check
          %p186 = pneg %p46
        $region22: #{module1562_forward.2} parent=19 // pred_check_branch
          %188 = sbr.rel (%p186) target = $region24
        $region23: #{module1562_forward.2} parent=19 // pred_region
          %s189 = smul.u32 2, %s20
          %p190 = scmp.lt.s32.totalorder %s19, 1
          %s191 = scalar_select %p190, %s19, 1
          %p192 = scmp.lt.s32.totalorder %s189, 1
          %s193 = scalar_select %p192, %s189, 1
          %s194 = smul.addr %s191, 32
          %s195 = sadd.s32 %s193, %s194
          %s196 = smul.addr %s195, 8
          %s197 = scalar_lea.vmem %s0, %s196
          %s198 = smul.u32 2, %s20
        $region24: #{module1562_forward.2} parent=19 // pred_fallthru
          _
      $region20: #{module1562_forward.2} parent=5 // pred_fallthru
        _
      %p199 = scmp.le.s32.totalorder 1, %s12
      %p200 = scmp.lt.s32.totalorder %s12, 3
      %p201 = pnand %p199, %p200
      %p202 = pneg %p201
      // Predicated region
      $region25: #{module1562_forward.2} parent=5 // pred_check
        _
      $region26: #{module1562_forward.2} parent=5 // pred_check_branch
        %204 = sbr.rel (%p201) target = $region28
      $region27: #{module1562_forward.2} parent=5 // pred_region
        %s205 = ssub.s32 %s12, 1
        // Predicated region
        $region29: #{module1562_forward.2} parent=27 // pred_check
          %p206 = pneg %p73
        $region30: #{module1562_forward.2} parent=27 // pred_check_branch
          %208 = sbr.rel (%p206) target = $region32
        $region31: #{module1562_forward.2} parent=27 // pred_region
          %210 = dma.done [#allocation3], 512
        $region32: #{module1562_forward.2} parent=27 // pred_fallthru
          _
        %s211 = smul.u32 2, %s22
        %p212 = scmp.lt.s32.totalorder %s21, 1
        %s213 = scalar_select %p212, %s21, 1
        %p214 = scmp.lt.s32.totalorder %s211, 1
        %s215 = scalar_select %p214, %s211, 1
        %s216 = smul.addr %s213, 32
        %s217 = sadd.s32 %s215, %s216
        %s218 = smul.addr %s217, 8
        %s219 = scalar_lea.vmem %s0, %s218
        %p220 = pneg %p52
        %p221 = pneg %p49
        %p222 = pneg %p73
        %p223 = pneg %p70
        %p224 = pneg %p101
        %p225 = pneg %p98
        %s226 = smul.u32 2, %s22
        %p227 = scmp.lt.s32.totalorder %s21, 1
        %s228 = scalar_select %p227, %s21, 1
        %p229 = scmp.lt.s32.totalorder %s226, 1
        %s230 = scalar_select %p229, %s226, 1
        %s231 = smul.addr %s228, 8
        %s232 = sadd.s32 %s230, %s231
        %s233 = smul.addr %s232, 4
        %s234 = scalar_lea.vmem %s2, %s233
        %p235 = pneg %p127
        %p236 = pneg %p124
        %p237 = scmp.lt.s32.totalorder %s21, 1
        %s238 = scalar_select %p237, %s21, 1
        %s239 = smul.addr %s238, 4
        %s240 = smul.addr %s239, 8
        %s241 = scalar_lea.vmem %s3, %s240
        %p242 = pneg %p153
        %p243 = pneg %p150
        %p244 = scmp.lt.s32.totalorder %s21, 1
        %s245 = scalar_select %p244, %s21, 1
        %s246 = smul.addr %s245, 4
        %s247 = smul.addr %s246, 8
        %s248 = scalar_lea.vmem %s4, %s247
        %s249 = smul.u32 2, %s22
        %p250 = scmp.lt.s32.totalorder %s21, 1
        %s251 = scalar_select %p250, %s21, 1
        %p252 = scmp.lt.s32.totalorder %s249, 1
        %s253 = scalar_select %p252, %s249, 1
        %s254 = smul.addr %s251, 32
        %s255 = sadd.s32 %s253, %s254
        %s256 = smul.addr %s255, 8
        %s257 = scalar_lea.vmem %s0, %s256
        %s258 = smul.u32 2, %s22
        %s259 = smul.u32 2, %s22
        %p260 = scmp.lt.s32.totalorder %s21, 1
        %s261 = scalar_select %p260, %s21, 1
        %p262 = scmp.lt.s32.totalorder %s259, 1
        %s263 = scalar_select %p262, %s259, 1
        %s264 = smul.addr %s261, 8
        %s265 = sadd.s32 %s263, %s264
        %s266 = smul.addr %s265, 4
        %s267 = scalar_lea.vmem %s2, %s266
        %s268 = smul.u32 2, %s22
        %p269 = scmp.lt.s32.totalorder %s21, 1
        %s270 = scalar_select %p269, %s21, 1
        %s271 = smul.addr %s270, 4
        %s272 = smul.addr %s271, 8
        %s273 = scalar_lea.vmem %s3, %s272
        %p274 = scmp.lt.s32.totalorder %s21, 1
        %s275 = scalar_select %p274, %s21, 1
        %s276 = smul.addr %s275, 4
        %s277 = smul.addr %s276, 8
        %s278 = scalar_lea.vmem %s4, %s277
        %p279 = scmp.eq.s32.totalorder %s22, 0
        // Predicated region
        $region33: #{module1562_forward.2} parent=27 // pred_check
          %p280 = pneg %p279
        $region34: #{module1562_forward.2} parent=27 // pred_check_branch
          %282 = sbr.rel (%p280) target = $region36
        $region35: #{module1562_forward.2} parent=27 // pred_region
          %vm283 = vcmask 7168
          %284 = vst.msk [vmem:[%s273] sm:$0xff] %vm283, 0.0
          %285 = vst.msk [vmem:[%s273 + $0x8] sm:$0xff] %vm283, 0.0
          %286 = vst.msk [vmem:[%s273 + $0x10] sm:$0xff] %vm283, 0.0
          %287 = vst.msk [vmem:[%s273 + $0x18] sm:$0xff] %vm283, 0.0
          %288 = vst.msk [vmem:[%s278] sm:$0xff] %vm283, 0.0
          %289 = vst.msk [vmem:[%s278 + $0x8] sm:$0xff] %vm283, 0.0
          %290 = vst.msk [vmem:[%s278 + $0x10] sm:$0xff] %vm283, 0.0
          %291 = vst.msk [vmem:[%s278 + $0x18] sm:$0xff] %vm283, 0.0
        $region36: #{module1562_forward.2} parent=27 // pred_fallthru
          _
        %v292 = vld [vmem:[#allocation2] sm:$0xff]
        %v293 = vld [vmem:[#allocation2 + $0x8] sm:$0xff]
        %v294 = vld [vmem:[#allocation2 + $0x10] sm:$0xff]
        %v295 = vld [vmem:[#allocation2 + $0x18] sm:$0xff]
        %v296 = vld [vmem:[%s257] sm:$0xff]
        %v297 = vld [vmem:[%s257 + $0x8] sm:$0xff]
        %v298 = vld [vmem:[%s257 + $0x10] sm:$0xff]
        %v299 = vld [vmem:[%s257 + $0x18] sm:$0xff]
        %v300 = vld [vmem:[%s257 + $0x20] sm:$0xff]
        %v301 = vld [vmem:[%s257 + $0x28] sm:$0xff]
        %v302 = vld [vmem:[%s257 + $0x30] sm:$0xff]
        %v303 = vld [vmem:[%s257 + $0x38] sm:$0xff]
        %v304 = vld [vmem:[%s257 + $0x40] sm:$0xff]
        %v305 = vld [vmem:[%s257 + $0x48] sm:$0xff]
        %v306 = vld [vmem:[%s257 + $0x50] sm:$0xff]
        %v307 = vld [vmem:[%s257 + $0x58] sm:$0xff]
        %v308 = vld [vmem:[%s257 + $0x60] sm:$0xff]
        %v309 = vld [vmem:[%s257 + $0x68] sm:$0xff]
        %v310 = vld [vmem:[%s257 + $0x70] sm:$0xff]
        %v311 = vld [vmem:[%s257 + $0x78] sm:$0xff]
        %v312 = vld [vmem:[%s257 + $0x80] sm:$0xff]
        %v313 = vld [vmem:[%s257 + $0x88] sm:$0xff]
        %v314 = vld [vmem:[%s257 + $0x90] sm:$0xff]
        %v315 = vld [vmem:[%s257 + $0x98] sm:$0xff]
        %v316 = vld [vmem:[%s257 + $0xa0] sm:$0xff]
        %v317 = vld [vmem:[%s257 + $0xa8] sm:$0xff]
        %v318 = vld [vmem:[%s257 + $0xb0] sm:$0xff]
        %v319 = vld [vmem:[%s257 + $0xb8] sm:$0xff]
        %v320 = vld [vmem:[%s257 + $0xc0] sm:$0xff]
        %v321 = vld [vmem:[%s257 + $0xc8] sm:$0xff]
        %v322 = vld [vmem:[%s257 + $0xd0] sm:$0xff]
        %v323 = vld [vmem:[%s257 + $0xd8] sm:$0xff]
        %v324 = vld [vmem:[%s257 + $0xe0] sm:$0xff]
        %v325 = vld [vmem:[%s257 + $0xe8] sm:$0xff]
        %v326 = vld [vmem:[%s257 + $0xf0] sm:$0xff]
        %v327 = vld [vmem:[%s257 + $0xf8] sm:$0xff]
        %328 = vmatpush.msra.mxu0 %v326
        %329 = vmatpush.msra.mxu0 %v324
        %330 = vmatpush.msra.mxu0 %v322
        %331 = vmatpush.msra.mxu0 %v320
        %332 = vmatpush.msra.mxu0 %v318
        %333 = vmatpush.msra.mxu0 %v316
        %334 = vmatpush.msra.mxu0 %v314
        %335 = vmatpush.msra.mxu0 %v312
        %336 = vmatpush.msra.mxu0 %v310
        %337 = vmatpush.msra.mxu0 %v308
        %338 = vmatpush.msra.mxu0 %v306
        %339 = vmatpush.msra.mxu0 %v304
        %340 = vmatpush.msra.mxu0 %v302
        %341 = vmatpush.msra.mxu0 %v300
        %342 = vmatpush.msra.mxu0 %v298
        %343 = vmatpush.msra.mxu0 %v296
        %344 = vmatmul.f32.gmra.mxu0 %v292
        %v345 = vpop.f32.mrf.mxu0
        %v346 = vadd.f32 0.0, %v345
        %347 = vmatmul.f32.gmra.mxu0 %v293
        %v348 = vpop.f32.mrf.mxu0
        %v349 = vadd.f32 0.0, %v348
        %350 = vmatmul.f32.gmra.mxu0 %v294
        %v351 = vpop.f32.mrf.mxu0
        %v352 = vadd.f32 0.0, %v351
        %353 = vmatmul.f32.gmra.mxu0 %v295
        %v354 = vpop.f32.mrf.mxu0
        %v355 = vadd.f32 0.0, %v354
        %356 = vdwg.mxu0
        %357 = vmatpush.msra.mxu0 %v327
        %358 = vmatpush.msra.mxu0 %v325
        %359 = vmatpush.msra.mxu0 %v323
        %360 = vmatpush.msra.mxu0 %v321
        %361 = vmatpush.msra.mxu0 %v319
        %362 = vmatpush.msra.mxu0 %v317
        %363 = vmatpush.msra.mxu0 %v315
        %364 = vmatpush.msra.mxu0 %v313
        %365 = vmatpush.msra.mxu0 %v311
        %366 = vmatpush.msra.mxu0 %v309
        %367 = vmatpush.msra.mxu0 %v307
        %368 = vmatpush.msra.mxu0 %v305
        %369 = vmatpush.msra.mxu0 %v303
        %370 = vmatpush.msra.mxu0 %v301
        %371 = vmatpush.msra.mxu0 %v299
        %372 = vmatpush.msra.mxu0 %v297
        %373 = vmatmul.f32.gmra.mxu0 %v292
        %v374 = vpop.f32.mrf.mxu0
        %v375 = vadd.f32 0.0, %v374
        %376 = vmatmul.f32.gmra.mxu0 %v293
        %v377 = vpop.f32.mrf.mxu0
        %v378 = vadd.f32 0.0, %v377
        %379 = vmatmul.f32.gmra.mxu0 %v294
        %v380 = vpop.f32.mrf.mxu0
        %v381 = vadd.f32 0.0, %v380
        %382 = vmatmul.f32.gmra.mxu0 %v295
        %v383 = vpop.f32.mrf.mxu0
        %v384 = vadd.f32 0.0, %v383
        %385 = vdwg.mxu0
        %v386 = vpack.c.bf16 %v375, %v346
        %v387 = vpack.c.bf16 %v378, %v349
        %v388 = vpack.c.bf16 %v381, %v352
        %v389 = vpack.c.bf16 %v384, %v355
        %390 = vst [vmem:[%s267] sm:$0xff] %v386
        %391 = vst [vmem:[%s267 + $0x8] sm:$0xff] %v387
        %392 = vst [vmem:[%s267 + $0x10] sm:$0xff] %v388
        %393 = vst [vmem:[%s267 + $0x18] sm:$0xff] %v389
        %v394 = vld [vmem:[%s273] sm:$0xff]
        %v395 = vld [vmem:[%s273 + $0x8] sm:$0xff]
        %v396 = vld [vmem:[%s273 + $0x10] sm:$0xff]
        %v397 = vld [vmem:[%s273 + $0x18] sm:$0xff]
        %v398 = vadd.f32 %v346, %v375
        %399 = vadd.xlane.f32.xlu0 %v398
        %v400 = vpop.xlane.xlu0 %399
        %v401 = vadd.f32 %v349, %v378
        %402 = vadd.xlane.f32.xlu0 %v401
        %v403 = vpop.xlane.xlu0 %402
        %v404 = vadd.f32 %v352, %v381
        %405 = vadd.xlane.f32.xlu0 %v404
        %v406 = vpop.xlane.xlu0 %405
        %v407 = vadd.f32 %v355, %v384
        %408 = vadd.xlane.f32.xlu0 %v407
        %v409 = vpop.xlane.xlu0 %408
        %v410 = vadd.f32 %v394, %v400
        %v411 = vadd.f32 %v395, %v403
        %v412 = vadd.f32 %v396, %v406
        %v413 = vadd.f32 %v397, %v409
        %vm414 = vcmask 7168
        %415 = vst.msk [vmem:[%s273] sm:$0xff] %vm414, %v410
        %416 = vst.msk [vmem:[%s273 + $0x8] sm:$0xff] %vm414, %v411
        %417 = vst.msk [vmem:[%s273 + $0x10] sm:$0xff] %vm414, %v412
        %418 = vst.msk [vmem:[%s273 + $0x18] sm:$0xff] %vm414, %v413
        %v419 = vld [vmem:[%s278] sm:$0xff]
        %v420 = vld [vmem:[%s278 + $0x8] sm:$0xff]
        %v421 = vld [vmem:[%s278 + $0x10] sm:$0xff]
        %v422 = vld [vmem:[%s278 + $0x18] sm:$0xff]
        %v423 = vmul.f32 %v346, %v346
        %v424 = vmul.f32 %v375, %v375
        %v425 = vmul.f32 %v349, %v349
        %v426 = vmul.f32 %v378, %v378
        %v427 = vmul.f32 %v352, %v352
        %v428 = vmul.f32 %v381, %v381
        %v429 = vmul.f32 %v355, %v355
        %v430 = vmul.f32 %v384, %v384
        %v431 = vadd.f32 %v423, %v424
        %432 = vadd.xlane.f32.xlu0 %v431
        %v433 = vpop.xlane.xlu0 %432
        %v434 = vadd.f32 %v425, %v426
        %435 = vadd.xlane.f32.xlu0 %v434
        %v436 = vpop.xlane.xlu0 %435
        %v437 = vadd.f32 %v427, %v428
        %438 = vadd.xlane.f32.xlu0 %v437
        %v439 = vpop.xlane.xlu0 %438
        %v440 = vadd.f32 %v429, %v430
        %441 = vadd.xlane.f32.xlu0 %v440
        %v442 = vpop.xlane.xlu0 %441
        %v443 = vadd.f32 %v419, %v433
        %v444 = vadd.f32 %v420, %v436
        %v445 = vadd.f32 %v421, %v439
        %v446 = vadd.f32 %v422, %v442
        %447 = vst.msk [vmem:[%s278] sm:$0xff] %vm414, %v443
        %448 = vst.msk [vmem:[%s278 + $0x8] sm:$0xff] %vm414, %v444
        %449 = vst.msk [vmem:[%s278 + $0x10] sm:$0xff] %vm414, %v445
        %450 = vst.msk [vmem:[%s278 + $0x18] sm:$0xff] %vm414, %v446
        %s451 = smul.u32 2, %s22
        %p452 = scmp.lt.s32.totalorder %s21, 1
        %s453 = scalar_select %p452, %s21, 1
        %p454 = scmp.lt.s32.totalorder %s451, 1
        %s455 = scalar_select %p454, %s451, 1
        %s456 = smul.addr %s453, 8
        %s457 = sadd.s32 %s455, %s456
        %s458 = smul.addr %s457, 4
        %s459 = scalar_lea.vmem %s2, %s458
        %p460 = scmp.lt.s32.totalorder %s21, 1
        %s461 = scalar_select %p460, %s21, 1
        %s462 = smul.addr %s461, 4
        %s463 = smul.addr %s462, 8
        %s464 = scalar_lea.vmem %s3, %s463
        %p465 = scmp.lt.s32.totalorder %s21, 1
        %s466 = scalar_select %p465, %s21, 1
        %s467 = smul.addr %s466, 4
        %s468 = smul.addr %s467, 8
        %s469 = scalar_lea.vmem %s4, %s468
        // Predicated region
        $region37: #{module1562_forward.2} parent=27 // pred_check
          %p470 = pneg %p98
        $region38: #{module1562_forward.2} parent=27 // pred_check_branch
          %472 = sbr.rel (%p470) target = $region40
        $region39: #{module1562_forward.2} parent=27 // pred_region
          %s473 = smul.u32 2, %s22
        $region40: #{module1562_forward.2} parent=27 // pred_fallthru
          _
        // Predicated region
        $region41: #{module1562_forward.2} parent=27 // pred_check
          %p474 = pneg %p124
        $region42: #{module1562_forward.2} parent=27 // pred_check_branch
          %476 = sbr.rel (%p474) target = $region44
        $region43: #{module1562_forward.2} parent=27 // pred_region
          _
        $region44: #{module1562_forward.2} parent=27 // pred_fallthru
          _
        // Predicated region
        $region45: #{module1562_forward.2} parent=27 // pred_check
          %p477 = pneg %p150
        $region46: #{module1562_forward.2} parent=27 // pred_check_branch
          %479 = sbr.rel (%p477) target = $region48
        $region47: #{module1562_forward.2} parent=27 // pred_region
          _
        $region48: #{module1562_forward.2} parent=27 // pred_fallthru
          _
      $region28: #{module1562_forward.2} parent=5 // pred_fallthru
        _
      %p480 = scmp.le.s32.totalorder 2, %s12
      // Predicated region
      $region49: #{module1562_forward.2} parent=5 // pred_check
        %p481 = pneg %p480
      $region50: #{module1562_forward.2} parent=5 // pred_check_branch
        %483 = sbr.rel (%p481) target = $region52
      $region51: #{module1562_forward.2} parent=5 // pred_region
        %s484 = ssub.s32 %s12, 2
        // Predicated region
        $region53: #{module1562_forward.2} parent=51 // pred_check
          %p485 = pneg %p104
        $region54: #{module1562_forward.2} parent=51 // pred_check_branch
          %487 = sbr.rel (%p485) target = $region56
        $region55: #{module1562_forward.2} parent=51 // pred_region
          %s488 = smul.u32 2, %s24
          %p489 = scmp.lt.s32.totalorder %s23, 1
          %s490 = scalar_select %p489, %s23, 1
          %p491 = scmp.lt.s32.totalorder %s488, 1
          %s492 = scalar_select %p491, %s488, 1
          %s493 = smul.addr %s490, 8
          %s494 = sadd.s32 %s492, %s493
          %s495 = smul.addr %s494, 4
          %s496 = scalar_lea.vmem %s2, %s495
        $region56: #{module1562_forward.2} parent=51 // pred_fallthru
          _
        // Predicated region
        $region57: #{module1562_forward.2} parent=51 // pred_check
          %p497 = pneg %p130
        $region58: #{module1562_forward.2} parent=51 // pred_check_branch
          %499 = sbr.rel (%p497) target = $region60
        $region59: #{module1562_forward.2} parent=51 // pred_region
          %p500 = scmp.lt.s32.totalorder %s23, 1
          %s501 = scalar_select %p500, %s23, 1
          %s502 = smul.addr %s501, 4
          %s503 = smul.addr %s502, 8
          %s504 = scalar_lea.vmem %s3, %s503
        $region60: #{module1562_forward.2} parent=51 // pred_fallthru
          _
        // Predicated region
        $region61: #{module1562_forward.2} parent=51 // pred_check
          %p505 = pneg %p156
        $region62: #{module1562_forward.2} parent=51 // pred_check_branch
          %507 = sbr.rel (%p505) target = $region64
        $region63: #{module1562_forward.2} parent=51 // pred_region
          %p508 = scmp.lt.s32.totalorder %s23, 1
          %s509 = scalar_select %p508, %s23, 1
          %s510 = smul.addr %s509, 4
          %s511 = smul.addr %s510, 8
          %s512 = scalar_lea.vmem %s4, %s511
        $region64: #{module1562_forward.2} parent=51 // pred_fallthru
          _
      $region52: #{module1562_forward.2} parent=5 // pred_fallthru
        _
    $region6: #{module1562_forward.2} parent=1 // loop_footer
      %s16 = sadd.s32 1, %s12
    $region7: #{module1562_forward.2} parent=1 // loop_footer_branch
      %11 = sbr.rel target = $region3
    $region8: #{module1562_forward.2} parent=1 // loop_exit
      _
    %513 = vsyncpa [#allocation3], 1
    %s514 = scalar_lea.sflag [#allocation3], 1
    %515 = vsyncpa %s514, 1

// kernel: module1562_forward.3
$region0: #{module1562_forward.3}
  #allocation0 [shape = 'u32[]', space=smem, size = 0x4, offset = 0x4, fixed_abs, tag = 'smem constant byte address 0x4 - core index']
  #allocation1 [shape = 'u32[72,128]{1,0:T(1,128)}', space=vmem, size = 0x9000, scoped, tag = 'internal scratch']
  %s0 = inlined_call_operand.vmem [shape: bf16[2,32,256], index: 0, kind: input, shape index: {}]
  %s1 = inlined_call_operand.vmem [shape: f32[32,1], index: 1, kind: input, shape index: {}]
  %s2 = inlined_call_operand.vmem [shape: f32[32,1], index: 2, kind: input, shape index: {}]
  %s3 = inlined_call_operand.vmem [shape: bf16[704,32], index: 3, kind: input, shape index: {}]
  %s4 = inlined_call_operand.vmem [shape: f32[704,1], index: 4, kind: input, shape index: {}]
  %s5 = inlined_call_operand.vmem [shape: f32[2,704,256], index: 5, kind: output, shape index: {}]
  %s6 = sld [smem:[#allocation0]]
  $region53: #{module1562_forward.3} parent=0
    _
  %s8 = ssub.s32 1, %s6
  %s9 = scalar_select 0, %s8, %s6
  loop: start=0, step=1, limit=4
  $region2: #{module1562_forward.3} parent=0 // loop_pre_header
    _
  $region3: #{module1562_forward.3} parent=0 // loop_header
    %s11 = sphi 0, %s15
    %p12 = scmp.ge.s32.totalorder %s11, 4
    %s18 = sphi 0, %s30
    %s19 = sphi 0, %s26
    %s20 = sphi 0, %s18
    %s21 = sphi 0, %s19
    %s22 = sphi 0, %s20
    %s23 = sphi 0, %s21
    %s35 = sphi 0, %s37
    %s38 = sphi 0, %s35
    %s39 = sphi 0, %s38
    %s55 = sphi 0, %s39
    %s59 = sphi 0, %s59
    %s61 = sphi 0, %s59
    %s62 = sphi 0, %s61
    %s76 = sphi 0, %s62
    %s80 = sphi 0, %s80
    %s82 = sphi 0, %s80
    %s83 = sphi 0, %s82
    %s97 = sphi 0, %s83
    %s101 = sphi 0, %s101
    %s103 = sphi 0, %s101
    %s104 = sphi 0, %s103
    %s118 = sphi 0, %s104
    %s122 = sphi 0, %s122
    %s124 = sphi 0, %s122
    %s125 = sphi 0, %s124
    %s139 = sphi 0, %s125
    %s147 = sphi 0, %s149
    %s150 = sphi 0, %s147
    %s151 = sphi 0, %s150
    %s167 = sphi 0, %s151
  $region4: #{module1562_forward.3} parent=0 // loop_header_branch
    %14 = sbr.rel (%p12) target = $region8
  $region5: #{module1562_forward.3} parent=0 // loop_body
    %s16 = ssub.s32 %s11, 1
    %s17 = ssub.s32 %s11, 2
    %s24 = sadd.s32 1, %s19
    %p25 = scmp.ge.s32.totalorder %s24, 1
    %s26 = scalar_select %p25, 0, %s24
    %s27 = sadd.s32 1, %s18
    %s28 = scalar_select %p25, %s27, %s18
    %p29 = scmp.ge.s32.totalorder %s28, 2
    %s30 = scalar_select %p29, 0, %s28
    %s31 = ssub.s32 %s18, %s30
    %s32 = ssub.s32 %s19, %s26
    %s33 = sor.u32 %s31, %s32
    %p34 = scmp.eq.s32.totalorder %s33, 0
    %s36 = sadd.s32 %s35, 1
    %s37 = scalar_select %p34, %s35, %s36
    %p40 = pneg %p34
    %p41 = scmp.eq.s32.totalorder %s11, 1
    %p42 = por %p40, %p41
    %p43 = scmp.ne.s32.totalorder %s35, %s38
    %p44 = scmp.eq.s32.totalorder %s11, 0
    %p45 = por %p43, %p44
    %p46 = scmp.ne.s32.totalorder %s35, %s38
    %p47 = scmp.eq.s32.totalorder %s16, 1
    %p48 = por %p46, %p47
    %p49 = scmp.ne.s32.totalorder %s38, %s39
    %p50 = scmp.eq.s32.totalorder %s16, 0
    %p51 = por %p49, %p50
    %p52 = scmp.ne.s32.totalorder %s38, %s39
    %p53 = scmp.eq.s32.totalorder %s17, 1
    %p54 = por %p52, %p53
    %p56 = scmp.ne.s32.totalorder %s39, %s55
    %p57 = scmp.eq.s32.totalorder %s17, 0
    %p58 = por %p56, %p57
    %s60 = sadd.s32 %s59, 1
    %p63 = scmp.eq.s32.totalorder %s11, 1
    %p64 = scmp.ne.s32.totalorder %s59, %s61
    %p65 = scmp.eq.s32.totalorder %s11, 0
    %p66 = por %p64, %p65
    %p67 = scmp.ne.s32.totalorder %s59, %s61
    %p68 = scmp.eq.s32.totalorder %s16, 1
    %p69 = por %p67, %p68
    %p70 = scmp.ne.s32.totalorder %s61, %s62
    %p71 = scmp.eq.s32.totalorder %s16, 0
    %p72 = por %p70, %p71
    %p73 = scmp.ne.s32.totalorder %s61, %s62
    %p74 = scmp.eq.s32.totalorder %s17, 1
    %p75 = por %p73, %p74
    %p77 = scmp.ne.s32.totalorder %s62, %s76
    %p78 = scmp.eq.s32.totalorder %s17, 0
    %p79 = por %p77, %p78
    %s81 = sadd.s32 %s80, 1
    %p84 = scmp.eq.s32.totalorder %s11, 1
    %p85 = scmp.ne.s32.totalorder %s80, %s82
    %p86 = scmp.eq.s32.totalorder %s11, 0
    %p87 = por %p85, %p86
    %p88 = scmp.ne.s32.totalorder %s80, %s82
    %p89 = scmp.eq.s32.totalorder %s16, 1
    %p90 = por %p88, %p89
    %p91 = scmp.ne.s32.totalorder %s82, %s83
    %p92 = scmp.eq.s32.totalorder %s16, 0
    %p93 = por %p91, %p92
    %p94 = scmp.ne.s32.totalorder %s82, %s83
    %p95 = scmp.eq.s32.totalorder %s17, 1
    %p96 = por %p94, %p95
    %p98 = scmp.ne.s32.totalorder %s83, %s97
    %p99 = scmp.eq.s32.totalorder %s17, 0
    %p100 = por %p98, %p99
    %s102 = sadd.s32 %s101, 1
    %p105 = scmp.eq.s32.totalorder %s11, 1
    %p106 = scmp.ne.s32.totalorder %s101, %s103
    %p107 = scmp.eq.s32.totalorder %s11, 0
    %p108 = por %p106, %p107
    %p109 = scmp.ne.s32.totalorder %s101, %s103
    %p110 = scmp.eq.s32.totalorder %s16, 1
    %p111 = por %p109, %p110
    %p112 = scmp.ne.s32.totalorder %s103, %s104
    %p113 = scmp.eq.s32.totalorder %s16, 0
    %p114 = por %p112, %p113
    %p115 = scmp.ne.s32.totalorder %s103, %s104
    %p116 = scmp.eq.s32.totalorder %s17, 1
    %p117 = por %p115, %p116
    %p119 = scmp.ne.s32.totalorder %s104, %s118
    %p120 = scmp.eq.s32.totalorder %s17, 0
    %p121 = por %p119, %p120
    %s123 = sadd.s32 %s122, 1
    %p126 = scmp.eq.s32.totalorder %s11, 1
    %p127 = scmp.ne.s32.totalorder %s122, %s124
    %p128 = scmp.eq.s32.totalorder %s11, 0
    %p129 = por %p127, %p128
    %p130 = scmp.ne.s32.totalorder %s122, %s124
    %p131 = scmp.eq.s32.totalorder %s16, 1
    %p132 = por %p130, %p131
    %p133 = scmp.ne.s32.totalorder %s124, %s125
    %p134 = scmp.eq.s32.totalorder %s16, 0
    %p135 = por %p133, %p134
    %p136 = scmp.ne.s32.totalorder %s124, %s125
    %p137 = scmp.eq.s32.totalorder %s17, 1
    %p138 = por %p136, %p137
    %p140 = scmp.ne.s32.totalorder %s125, %s139
    %p141 = scmp.eq.s32.totalorder %s17, 0
    %p142 = por %p140, %p141
    %s143 = ssub.s32 %s18, %s30
    %s144 = ssub.s32 %s19, %s26
    %s145 = sor.u32 %s143, %s144
    %p146 = scmp.eq.s32.totalorder %s145, 0
    %s148 = sadd.s32 %s147, 1
    %s149 = scalar_select %p146, %s147, %s148
    %p152 = pneg %p146
    %p153 = scmp.eq.s32.totalorder %s11, 1
    %p154 = por %p152, %p153
    %p155 = scmp.ne.s32.totalorder %s147, %s150
    %p156 = scmp.eq.s32.totalorder %s11, 0
    %p157 = por %p155, %p156
    %p158 = scmp.ne.s32.totalorder %s147, %s150
    %p159 = scmp.eq.s32.totalorder %s16, 1
    %p160 = por %p158, %p159
    %p161 = scmp.ne.s32.totalorder %s150, %s151
    %p162 = scmp.eq.s32.totalorder %s16, 0
    %p163 = por %p161, %p162
    %p164 = scmp.ne.s32.totalorder %s150, %s151
    %p165 = scmp.eq.s32.totalorder %s17, 1
    %p166 = por %p164, %p165
    %p168 = scmp.ne.s32.totalorder %s151, %s167
    %p169 = scmp.eq.s32.totalorder %s17, 0
    %p170 = por %p168, %p169
    %p171 = scmp.le.s32.totalorder 1, %s11
    %p172 = scmp.lt.s32.totalorder %s11, 3
    %p173 = pnand %p171, %p172
    %p174 = pneg %p173
    // Predicated region
    $region9: #{module1562_forward.3} parent=5 // pred_check
      _
    $region10: #{module1562_forward.3} parent=5 // pred_check_branch
      %176 = sbr.rel (%p173) target = $region12
    $region11: #{module1562_forward.3} parent=5 // pred_region
      %s177 = ssub.s32 %s11, 1
      // Predicated region
      $region13: #{module1562_forward.3} parent=11 // pred_check
        %p178 = pneg %p72
      $region14: #{module1562_forward.3} parent=11 // pred_check_branch
        %180 = sbr.rel (%p178) target = $region16
      $region15: #{module1562_forward.3} parent=11 // pred_region
        _
      $region16: #{module1562_forward.3} parent=11 // pred_fallthru
        _
      // Predicated region
      $region17: #{module1562_forward.3} parent=11 // pred_check
        %p181 = pneg %p93
      $region18: #{module1562_forward.3} parent=11 // pred_check_branch
        %183 = sbr.rel (%p181) target = $region20
      $region19: #{module1562_forward.3} parent=11 // pred_region
        _
      $region20: #{module1562_forward.3} parent=11 // pred_fallthru
        _
      // Predicated region
      $region21: #{module1562_forward.3} parent=11 // pred_check
        %p184 = pneg %p114
      $region22: #{module1562_forward.3} parent=11 // pred_check_branch
        %186 = sbr.rel (%p184) target = $region24
      $region23: #{module1562_forward.3} parent=11 // pred_region
        _
      $region24: #{module1562_forward.3} parent=11 // pred_fallthru
        _
      // Predicated region
      $region25: #{module1562_forward.3} parent=11 // pred_check
        %p187 = pneg %p135
      $region26: #{module1562_forward.3} parent=11 // pred_check_branch
        %189 = sbr.rel (%p187) target = $region28
      $region27: #{module1562_forward.3} parent=11 // pred_region
        _
      $region28: #{module1562_forward.3} parent=11 // pred_fallthru
        _
    $region12: #{module1562_forward.3} parent=5 // pred_fallthru
      _
    %p190 = scmp.lt.s32.totalorder %s11, 2
    // Predicated region
    $region29: #{module1562_forward.3} parent=5 // pred_check
      %p191 = pneg %p190
    $region30: #{module1562_forward.3} parent=5 // pred_check_branch
      %193 = sbr.rel (%p191) target = $region32
    $region31: #{module1562_forward.3} parent=5 // pred_region
      // Predicated region
      $region33: #{module1562_forward.3} parent=31 // pred_check
        %p194 = pneg %p45
      $region34: #{module1562_forward.3} parent=31 // pred_check_branch
        %196 = sbr.rel (%p194) target = $region36
      $region35: #{module1562_forward.3} parent=31 // pred_region
        %s197 = smul.u32 2, %s19
        %p198 = scmp.lt.s32.totalorder %s18, 1
        %s199 = scalar_select %p198, %s18, 1
        %p200 = scmp.lt.s32.totalorder %s197, 1
        %s201 = scalar_select %p200, %s197, 1
        %s202 = smul.addr %s199, 8
        %s203 = sadd.s32 %s201, %s202
        %s204 = smul.addr %s203, 4
        %s205 = scalar_lea.vmem %s0, %s204
        %s206 = smul.u32 2, %s19
      $region36: #{module1562_forward.3} parent=31 // pred_fallthru
        _
    $region32: #{module1562_forward.3} parent=5 // pred_fallthru
      _
    %p207 = scmp.le.s32.totalorder 1, %s11
    %p208 = scmp.lt.s32.totalorder %s11, 3
    %p209 = pnand %p207, %p208
    %p210 = pneg %p209
    // Predicated region
    $region37: #{module1562_forward.3} parent=5 // pred_check
      _
    $region38: #{module1562_forward.3} parent=5 // pred_check_branch
      %212 = sbr.rel (%p209) target = $region40
    $region39: #{module1562_forward.3} parent=5 // pred_region
      %s213 = ssub.s32 %s11, 1
      %s214 = smul.u32 2, %s21
      %p215 = scmp.lt.s32.totalorder %s20, 1
      %s216 = scalar_select %p215, %s20, 1
      %p217 = scmp.lt.s32.totalorder %s214, 1
      %s218 = scalar_select %p217, %s214, 1
      %s219 = smul.addr %s216, 8
      %s220 = sadd.s32 %s218, %s219
      %s221 = smul.addr %s220, 4
      %s222 = scalar_lea.vmem %s0, %s221
      %p223 = pneg %p51
      %p224 = pneg %p48
      %p225 = pneg %p72
      %p226 = pneg %p69
      %p227 = pneg %p93
      %p228 = pneg %p90
      %p229 = pneg %p114
      %p230 = pneg %p111
      %p231 = pneg %p135
      %p232 = pneg %p132
      %p233 = pneg %p163
      %p234 = pneg %p160
      %s235 = smul.u32 2, %s21
      %p236 = scmp.lt.s32.totalorder %s20, 1
      %s237 = scalar_select %p236, %s20, 1
      %p238 = scmp.lt.s32.totalorder %s235, 1
      %s239 = scalar_select %p238, %s235, 1
      %s240 = smul.addr %s237, 176
      %s241 = sadd.s32 %s239, %s240
      %s242 = smul.addr %s241, 8
      %s243 = scalar_lea.vmem %s5, %s242
      %s244 = smul.u32 2, %s21
      %p245 = scmp.lt.s32.totalorder %s20, 1
      %s246 = scalar_select %p245, %s20, 1
      %p247 = scmp.lt.s32.totalorder %s244, 1
      %s248 = scalar_select %p247, %s244, 1
      %s249 = smul.addr %s246, 8
      %s250 = sadd.s32 %s248, %s249
      %s251 = smul.addr %s250, 4
      %s252 = scalar_lea.vmem %s0, %s251
      %s253 = smul.u32 2, %s21
      %s254 = smul.u32 2, %s21
      %p255 = scmp.lt.s32.totalorder %s20, 1
      %s256 = scalar_select %p255, %s20, 1
      %p257 = scmp.lt.s32.totalorder %s254, 1
      %s258 = scalar_select %p257, %s254, 1
      %s259 = smul.addr %s256, 176
      %s260 = sadd.s32 %s258, %s259
      %s261 = smul.addr %s260, 8
      %s262 = scalar_lea.vmem %s5, %s261
      %s263 = smul.u32 2, %s21
      %v265 = vld [vmem:[%s252] sm:$0xff]
      %v266 = vld [vmem:[%s252 + $0x8] sm:$0xff]
      %v267 = vld [vmem:[%s252 + $0x10] sm:$0xff]
      %v268 = vld [vmem:[%s252 + $0x18] sm:$0xff]
      %v269 = vunpack.c.l.bf16 %v265
      %v270 = vunpack.c.h.bf16 %v265
      %v271 = vunpack.c.l.bf16 %v266
      %v272 = vunpack.c.h.bf16 %v266
      %v273 = vunpack.c.l.bf16 %v267
      %v274 = vunpack.c.h.bf16 %v267
      %v275 = vunpack.c.l.bf16 %v268
      %v276 = vunpack.c.h.bf16 %v268
      %v277 = vld [vmem:[%s1] sm:$0xff]
      %v278 = vld [vmem:[%s1 + $0x8] sm:$0xff]
      %v279 = vld [vmem:[%s1 + $0x10] sm:$0xff]
      %v280 = vld [vmem:[%s1 + $0x18] sm:$0xff]
      %282 = vset.pattern.permute.xlu0 0
      %283 = vperm.xlu0 %282, %v277
      %v284 = vpop.permute.xlu0 %283
      %287 = vset.pattern.permute.xlu0 0
      %288 = vperm.xlu0 %287, %v278
      %v289 = vpop.permute.xlu0 %288
      %292 = vset.pattern.permute.xlu0 0
      %293 = vperm.xlu0 %292, %v279
      %v294 = vpop.permute.xlu0 %293
      %297 = vset.pattern.permute.xlu0 0
      %298 = vperm.xlu0 %297, %v280
      %v299 = vpop.permute.xlu0 %298
      %v301 = vmul.f32 %v269, %v284
      %v302 = vmul.f32 %v270, %v284
      %v303 = vmul.f32 %v271, %v289
      %v304 = vmul.f32 %v272, %v289
      %v305 = vmul.f32 %v273, %v294
      %v306 = vmul.f32 %v274, %v294
      %v307 = vmul.f32 %v275, %v299
      %v308 = vmul.f32 %v276, %v299
      %v309 = vld [vmem:[%s2] sm:$0xff]
      %v310 = vld [vmem:[%s2 + $0x8] sm:$0xff]
      %v311 = vld [vmem:[%s2 + $0x10] sm:$0xff]
      %v312 = vld [vmem:[%s2 + $0x18] sm:$0xff]
      %314 = vset.pattern.permute.xlu0 0
      %315 = vperm.xlu0 %314, %v309
      %v316 = vpop.permute.xlu0 %315
      %319 = vset.pattern.permute.xlu0 0
      %320 = vperm.xlu0 %319, %v310
      %v321 = vpop.permute.xlu0 %320
      %324 = vset.pattern.permute.xlu0 0
      %325 = vperm.xlu0 %324, %v311
      %v326 = vpop.permute.xlu0 %325
      %329 = vset.pattern.permute.xlu0 0
      %330 = vperm.xlu0 %329, %v312
      %v331 = vpop.permute.xlu0 %330
      %v333 = vadd.f32 %v301, %v316
      %v334 = vadd.f32 %v302, %v316
      %v335 = vadd.f32 %v303, %v321
      %v336 = vadd.f32 %v304, %v321
      %v337 = vadd.f32 %v305, %v326
      %v338 = vadd.f32 %v306, %v326
      %v339 = vadd.f32 %v307, %v331
      %v340 = vadd.f32 %v308, %v331
      %v341 = vmax.f32 %v333, 0.0
      %v342 = vmax.f32 %v334, 0.0
      %v343 = vmax.f32 %v335, 0.0
      %v344 = vmax.f32 %v336, 0.0
      %v345 = vmax.f32 %v337, 0.0
      %v346 = vmax.f32 %v338, 0.0
      %v347 = vmax.f32 %v339, 0.0
      %v348 = vmax.f32 %v340, 0.0
      %v349 = vld [vmem:[%s3] sm:$0xf]
      %v350 = vld [vmem:[%s3 + $0x4] sm:$0xf]
      %v351 = vld [vmem:[%s3 + $0x8] sm:$0xf]
      %v352 = vld [vmem:[%s3 + $0xc] sm:$0xf]
      %v353 = vld [vmem:[%s3 + $0x10] sm:$0xf]
      %v354 = vld [vmem:[%s3 + $0x14] sm:$0xf]
      %v355 = vld [vmem:[%s3 + $0x18] sm:$0xf]
      %v356 = vld [vmem:[%s3 + $0x1c] sm:$0xf]
      %v357 = vld [vmem:[%s3 + $0x20] sm:$0xf]
      %v358 = vld [vmem:[%s3 + $0x24] sm:$0xf]
      %v359 = vld [vmem:[%s3 + $0x28] sm:$0xf]
      %v360 = vld [vmem:[%s3 + $0x2c] sm:$0xf]
      %v361 = vld [vmem:[%s3 + $0x30] sm:$0xf]
      %v362 = vld [vmem:[%s3 + $0x34] sm:$0xf]
      %v363 = vld [vmem:[%s3 + $0x38] sm:$0xf]
      %v364 = vld [vmem:[%s3 + $0x3c] sm:$0xf]
      %v365 = vld [vmem:[%s3 + $0x40] sm:$0xf]
      %v366 = vld [vmem:[%s3 + $0x44] sm:$0xf]
      %v367 = vld [vmem:[%s3 + $0x48] sm:$0xf]
      %v368 = vld [vmem:[%s3 + $0x4c] sm:$0xf]
      %v369 = vld [vmem:[%s3 + $0x50] sm:$0xf]
      %v370 = vld [vmem:[%s3 + $0x54] sm:$0xf]
      %v371 = vld [vmem:[%s3 + $0x58] sm:$0xf]
      %v372 = vld [vmem:[%s3 + $0x5c] sm:$0xf]
      %v373 = vld [vmem:[%s3 + $0x60] sm:$0xf]
      %v374 = vld [vmem:[%s3 + $0x64] sm:$0xf]
      %v375 = vld [vmem:[%s3 + $0x68] sm:$0xf]
      %v376 = vld [vmem:[%s3 + $0x6c] sm:$0xf]
      %v377 = vld [vmem:[%s3 + $0x70] sm:$0xf]
      %v378 = vld [vmem:[%s3 + $0x74] sm:$0xf]
      %v379 = vld [vmem:[%s3 + $0x78] sm:$0xf]
      %v380 = vld [vmem:[%s3 + $0x7c] sm:$0xf]
      %v381 = vld [vmem:[%s3 + $0x80] sm:$0xf]
      %v382 = vld [vmem:[%s3 + $0x84] sm:$0xf]
      %v383 = vld [vmem:[%s3 + $0x88] sm:$0xf]
      %v384 = vld [vmem:[%s3 + $0x8c] sm:$0xf]
      %v385 = vld [vmem:[%s3 + $0x90] sm:$0xf]
      %v386 = vld [vmem:[%s3 + $0x94] sm:$0xf]
      %v387 = vld [vmem:[%s3 + $0x98] sm:$0xf]
      %v388 = vld [vmem:[%s3 + $0x9c] sm:$0xf]
      %v389 = vld [vmem:[%s3 + $0xa0] sm:$0xf]
      %v390 = vld [vmem:[%s3 + $0xa4] sm:$0xf]
      %v391 = vld [vmem:[%s3 + $0xa8] sm:$0xf]
      %v392 = vld [vmem:[%s3 + $0xac] sm:$0xf]
      %v393 = vld [vmem:[%s3 + $0xb0] sm:$0xf]
      %v394 = vld [vmem:[%s3 + $0xb4] sm:$0xf]
      %v395 = vld [vmem:[%s3 + $0xb8] sm:$0xf]
      %v396 = vld [vmem:[%s3 + $0xbc] sm:$0xf]
      %v397 = vld [vmem:[%s3 + $0xc0] sm:$0xf]
      %v398 = vld [vmem:[%s3 + $0xc4] sm:$0xf]
      %v399 = vld [vmem:[%s3 + $0xc8] sm:$0xf]
      %v400 = vld [vmem:[%s3 + $0xcc] sm:$0xf]
      %v401 = vld [vmem:[%s3 + $0xd0] sm:$0xf]
      %v402 = vld [vmem:[%s3 + $0xd4] sm:$0xf]
      %v403 = vld [vmem:[%s3 + $0xd8] sm:$0xf]
      %v404 = vld [vmem:[%s3 + $0xdc] sm:$0xf]
      %v405 = vld [vmem:[%s3 + $0xe0] sm:$0xf]
      %v406 = vld [vmem:[%s3 + $0xe4] sm:$0xf]
      %v407 = vld [vmem:[%s3 + $0xe8] sm:$0xf]
      %v408 = vld [vmem:[%s3 + $0xec] sm:$0xf]
      %v409 = vld [vmem:[%s3 + $0xf0] sm:$0xf]
      %v410 = vld [vmem:[%s3 + $0xf4] sm:$0xf]
      %v411 = vld [vmem:[%s3 + $0xf8] sm:$0xf]
      %v412 = vld [vmem:[%s3 + $0xfc] sm:$0xf]
      %v413 = vld [vmem:[%s3 + $0x100] sm:$0xf]
      %v414 = vld [vmem:[%s3 + $0x104] sm:$0xf]
      %v415 = vld [vmem:[%s3 + $0x108] sm:$0xf]
      %v416 = vld [vmem:[%s3 + $0x10c] sm:$0xf]
      %v417 = vld [vmem:[%s3 + $0x110] sm:$0xf]
      %v418 = vld [vmem:[%s3 + $0x114] sm:$0xf]
      %v419 = vld [vmem:[%s3 + $0x118] sm:$0xf]
      %v420 = vld [vmem:[%s3 + $0x11c] sm:$0xf]
      %v421 = vld [vmem:[%s3 + $0x120] sm:$0xf]
      %v422 = vld [vmem:[%s3 + $0x124] sm:$0xf]
      %v423 = vld [vmem:[%s3 + $0x128] sm:$0xf]
      %v424 = vld [vmem:[%s3 + $0x12c] sm:$0xf]
      %v425 = vld [vmem:[%s3 + $0x130] sm:$0xf]
      %v426 = vld [vmem:[%s3 + $0x134] sm:$0xf]
      %v427 = vld [vmem:[%s3 + $0x138] sm:$0xf]
      %v428 = vld [vmem:[%s3 + $0x13c] sm:$0xf]
      %v429 = vld [vmem:[%s3 + $0x140] sm:$0xf]
      %v430 = vld [vmem:[%s3 + $0x144] sm:$0xf]
      %v431 = vld [vmem:[%s3 + $0x148] sm:$0xf]
      %v432 = vld [vmem:[%s3 + $0x14c] sm:$0xf]
      %v433 = vld [vmem:[%s3 + $0x150] sm:$0xf]
      %v434 = vld [vmem:[%s3 + $0x154] sm:$0xf]
      %v435 = vld [vmem:[%s3 + $0x158] sm:$0xf]
      %v436 = vld [vmem:[%s3 + $0x15c] sm:$0xf]
      %v437 = vpack.c.bf16 %v343, %v341
      %v438 = vpack.c.bf16 %v344, %v342
      %v439 = vpack.c.bf16 %v347, %v345
      %v440 = vpack.c.bf16 %v348, %v346
      %v441 = vld [vmem:[%s4] sm:$0xff]
      %v442 = vld [vmem:[%s4 + $0x8] sm:$0xff]
      %v443 = vld [vmem:[%s4 + $0x10] sm:$0xff]
      %v444 = vld [vmem:[%s4 + $0x18] sm:$0xff]
      %v445 = vld [vmem:[%s4 + $0x20] sm:$0xff]
      %v446 = vld [vmem:[%s4 + $0x28] sm:$0xff]
      %v447 = vld [vmem:[%s4 + $0x30] sm:$0xff]
      %v448 = vld [vmem:[%s4 + $0x38] sm:$0xff]
      %v449 = vld [vmem:[%s4 + $0x40] sm:$0xff]
      %v450 = vld [vmem:[%s4 + $0x48] sm:$0xff]
      %v451 = vld [vmem:[%s4 + $0x50] sm:$0xff]
      %v452 = vld [vmem:[%s4 + $0x58] sm:$0xff]
      %v453 = vld [vmem:[%s4 + $0x60] sm:$0xff]
      %v454 = vld [vmem:[%s4 + $0x68] sm:$0xff]
      %v455 = vld [vmem:[%s4 + $0x70] sm:$0xff]
      %v456 = vld [vmem:[%s4 + $0x78] sm:$0xff]
      %v457 = vld [vmem:[%s4 + $0x80] sm:$0xff]
      %v458 = vld [vmem:[%s4 + $0x88] sm:$0xff]
      %v459 = vld [vmem:[%s4 + $0x90] sm:$0xff]
      %v460 = vld [vmem:[%s4 + $0x98] sm:$0xff]
      %v461 = vld [vmem:[%s4 + $0xa0] sm:$0xff]
      %v462 = vld [vmem:[%s4 + $0xa8] sm:$0xff]
      %v463 = vld [vmem:[%s4 + $0xb0] sm:$0xff]
      %v464 = vld [vmem:[%s4 + $0xb8] sm:$0xff]
      %v465 = vld [vmem:[%s4 + $0xc0] sm:$0xff]
      %v466 = vld [vmem:[%s4 + $0xc8] sm:$0xff]
      %v467 = vld [vmem:[%s4 + $0xd0] sm:$0xff]
      %v468 = vld [vmem:[%s4 + $0xd8] sm:$0xff]
      %v469 = vld [vmem:[%s4 + $0xe0] sm:$0xff]
      %v470 = vld [vmem:[%s4 + $0xe8] sm:$0xff]
      %v471 = vld [vmem:[%s4 + $0xf0] sm:$0xff]
      %v472 = vld [vmem:[%s4 + $0xf8] sm:$0xff]
      %v473 = vld [vmem:[%s4 + $0x100] sm:$0xff]
      %v474 = vld [vmem:[%s4 + $0x108] sm:$0xff]
      %v475 = vld [vmem:[%s4 + $0x110] sm:$0xff]
      %v476 = vld [vmem:[%s4 + $0x118] sm:$0xff]
      %v477 = vld [vmem:[%s4 + $0x120] sm:$0xff]
      %v478 = vld [vmem:[%s4 + $0x128] sm:$0xff]
      %v479 = vld [vmem:[%s4 + $0x130] sm:$0xff]
      %v480 = vld [vmem:[%s4 + $0x138] sm:$0xff]
      %v481 = vld [vmem:[%s4 + $0x140] sm:$0xff]
      %v482 = vld [vmem:[%s4 + $0x148] sm:$0xff]
      %v483 = vld [vmem:[%s4 + $0x150] sm:$0xff]
      %v484 = vld [vmem:[%s4 + $0x158] sm:$0xff]
      %v485 = vld [vmem:[%s4 + $0x160] sm:$0xff]
      %v486 = vld [vmem:[%s4 + $0x168] sm:$0xff]
      %v487 = vld [vmem:[%s4 + $0x170] sm:$0xff]
      %v488 = vld [vmem:[%s4 + $0x178] sm:$0xff]
      %v489 = vld [vmem:[%s4 + $0x180] sm:$0xff]
      %v490 = vld [vmem:[%s4 + $0x188] sm:$0xff]
      %v491 = vld [vmem:[%s4 + $0x190] sm:$0xff]
      %v492 = vld [vmem:[%s4 + $0x198] sm:$0xff]
      %v493 = vld [vmem:[%s4 + $0x1a0] sm:$0xff]
      %v494 = vld [vmem:[%s4 + $0x1a8] sm:$0xff]
      %v495 = vld [vmem:[%s4 + $0x1b0] sm:$0xff]
      %v496 = vld [vmem:[%s4 + $0x1b8] sm:$0xff]
      %v497 = vld [vmem:[%s4 + $0x1c0] sm:$0xff]
      %v498 = vld [vmem:[%s4 + $0x1c8] sm:$0xff]
      %v499 = vld [vmem:[%s4 + $0x1d0] sm:$0xff]
      %v500 = vld [vmem:[%s4 + $0x1d8] sm:$0xff]
      %v501 = vld [vmem:[%s4 + $0x1e0] sm:$0xff]
      %v502 = vld [vmem:[%s4 + $0x1e8] sm:$0xff]
      %v503 = vld [vmem:[%s4 + $0x1f0] sm:$0xff]
      %v504 = vld [vmem:[%s4 + $0x1f8] sm:$0xff]
      %v505 = vld [vmem:[%s4 + $0x200] sm:$0xff]
      %v506 = vld [vmem:[%s4 + $0x208] sm:$0xff]
      %v507 = vld [vmem:[%s4 + $0x210] sm:$0xff]
      %v508 = vld [vmem:[%s4 + $0x218] sm:$0xff]
      %v509 = vld [vmem:[%s4 + $0x220] sm:$0xff]
      %v510 = vld [vmem:[%s4 + $0x228] sm:$0xff]
      %v511 = vld [vmem:[%s4 + $0x230] sm:$0xff]
      %v512 = vld [vmem:[%s4 + $0x238] sm:$0xff]
      %v513 = vld [vmem:[%s4 + $0x240] sm:$0xff]
      %v514 = vld [vmem:[%s4 + $0x248] sm:$0xff]
      %v515 = vld [vmem:[%s4 + $0x250] sm:$0xff]
      %v516 = vld [vmem:[%s4 + $0x258] sm:$0xff]
      %v517 = vld [vmem:[%s4 + $0x260] sm:$0xff]
      %v518 = vld [vmem:[%s4 + $0x268] sm:$0xff]
      %v519 = vld [vmem:[%s4 + $0x270] sm:$0xff]
      %v520 = vld [vmem:[%s4 + $0x278] sm:$0xff]
      %v521 = vld [vmem:[%s4 + $0x280] sm:$0xff]
      %v522 = vld [vmem:[%s4 + $0x288] sm:$0xff]
      %v523 = vld [vmem:[%s4 + $0x290] sm:$0xff]
      %v524 = vld [vmem:[%s4 + $0x298] sm:$0xff]
      %v525 = vld [vmem:[%s4 + $0x2a0] sm:$0xff]
      %v526 = vld [vmem:[%s4 + $0x2a8] sm:$0xff]
      %v527 = vld [vmem:[%s4 + $0x2b0] sm:$0xff]
      %v528 = vld [vmem:[%s4 + $0x2b8] sm:$0xff]
      %530 = vset.pattern.permute.xlu0 0
      %531 = vperm.xlu0 %530, %v441
      %v532 = vpop.permute.xlu0 %531
      %535 = vset.pattern.permute.xlu0 0
      %536 = vperm.xlu0 %535, %v442
      %v537 = vpop.permute.xlu0 %536
      %540 = vset.pattern.permute.xlu0 0
      %541 = vperm.xlu0 %540, %v443
      %v542 = vpop.permute.xlu0 %541
      %545 = vset.pattern.permute.xlu0 0
      %546 = vperm.xlu0 %545, %v444
      %v547 = vpop.permute.xlu0 %546
      %550 = vset.pattern.permute.xlu0 0
      %551 = vperm.xlu0 %550, %v445
      %v552 = vpop.permute.xlu0 %551
      %555 = vset.pattern.permute.xlu0 0
      %556 = vperm.xlu0 %555, %v446
      %v557 = vpop.permute.xlu0 %556
      %560 = vset.pattern.permute.xlu0 0
      %561 = vperm.xlu0 %560, %v447
      %v562 = vpop.permute.xlu0 %561
      %565 = vset.pattern.permute.xlu0 0
      %566 = vperm.xlu0 %565, %v448
      %v567 = vpop.permute.xlu0 %566
      %570 = vset.pattern.permute.xlu0 0
      %571 = vperm.xlu0 %570, %v449
      %v572 = vpop.permute.xlu0 %571
      %575 = vset.pattern.permute.xlu0 0
      %576 = vperm.xlu0 %575, %v450
      %v577 = vpop.permute.xlu0 %576
      %580 = vset.pattern.permute.xlu0 0
      %581 = vperm.xlu0 %580, %v451
      %v582 = vpop.permute.xlu0 %581
      %585 = vset.pattern.permute.xlu0 0
      %586 = vperm.xlu0 %585, %v452
      %v587 = vpop.permute.xlu0 %586
      %590 = vset.pattern.permute.xlu0 0
      %591 = vperm.xlu0 %590, %v453
      %v592 = vpop.permute.xlu0 %591
      %595 = vset.pattern.permute.xlu0 0
      %596 = vperm.xlu0 %595, %v454
      %v597 = vpop.permute.xlu0 %596
      %600 = vset.pattern.permute.xlu0 0
      %601 = vperm.xlu0 %600, %v455
      %v602 = vpop.permute.xlu0 %601
      %605 = vset.pattern.permute.xlu0 0
      %606 = vperm.xlu0 %605, %v456
      %v607 = vpop.permute.xlu0 %606
      %610 = vset.pattern.permute.xlu0 0
      %611 = vperm.xlu0 %610, %v457
      %v612 = vpop.permute.xlu0 %611
      %615 = vset.pattern.permute.xlu0 0
      %616 = vperm.xlu0 %615, %v458
      %v617 = vpop.permute.xlu0 %616
      %620 = vset.pattern.permute.xlu0 0
      %621 = vperm.xlu0 %620, %v459
      %v622 = vpop.permute.xlu0 %621
      %625 = vset.pattern.permute.xlu0 0
      %626 = vperm.xlu0 %625, %v460
      %v627 = vpop.permute.xlu0 %626
      %630 = vset.pattern.permute.xlu0 0
      %631 = vperm.xlu0 %630, %v461
      %v632 = vpop.permute.xlu0 %631
      %635 = vset.pattern.permute.xlu0 0
      %636 = vperm.xlu0 %635, %v462
      %v637 = vpop.permute.xlu0 %636
      %640 = vset.pattern.permute.xlu0 0
      %641 = vperm.xlu0 %640, %v463
      %v642 = vpop.permute.xlu0 %641
      %645 = vset.pattern.permute.xlu0 0
      %646 = vperm.xlu0 %645, %v464
      %v647 = vpop.permute.xlu0 %646
      %650 = vset.pattern.permute.xlu0 0
      %651 = vperm.xlu0 %650, %v465
      %v652 = vpop.permute.xlu0 %651
      %655 = vset.pattern.permute.xlu0 0
      %656 = vperm.xlu0 %655, %v466
      %v657 = vpop.permute.xlu0 %656
      %660 = vset.pattern.permute.xlu0 0
      %661 = vperm.xlu0 %660, %v467
      %v662 = vpop.permute.xlu0 %661
      %665 = vset.pattern.permute.xlu0 0
      %666 = vperm.xlu0 %665, %v468
      %v667 = vpop.permute.xlu0 %666
      %670 = vset.pattern.permute.xlu0 0
      %671 = vperm.xlu0 %670, %v469
      %v672 = vpop.permute.xlu0 %671
      %675 = vset.pattern.permute.xlu0 0
      %676 = vperm.xlu0 %675, %v470
      %v677 = vpop.permute.xlu0 %676
      %680 = vset.pattern.permute.xlu0 0
      %681 = vperm.xlu0 %680, %v471
      %v682 = vpop.permute.xlu0 %681
      %685 = vset.pattern.permute.xlu0 0
      %686 = vperm.xlu0 %685, %v472
      %v687 = vpop.permute.xlu0 %686
      %690 = vset.pattern.permute.xlu0 0
      %691 = vperm.xlu0 %690, %v473
      %v692 = vpop.permute.xlu0 %691
      %695 = vset.pattern.permute.xlu0 0
      %696 = vperm.xlu0 %695, %v474
      %v697 = vpop.permute.xlu0 %696
      %700 = vset.pattern.permute.xlu0 0
      %701 = vperm.xlu0 %700, %v475
      %v702 = vpop.permute.xlu0 %701
      %705 = vset.pattern.permute.xlu0 0
      %706 = vperm.xlu0 %705, %v476
      %v707 = vpop.permute.xlu0 %706
      %710 = vset.pattern.permute.xlu0 0
      %711 = vperm.xlu0 %710, %v477
      %v712 = vpop.permute.xlu0 %711
      %715 = vset.pattern.permute.xlu0 0
      %716 = vperm.xlu0 %715, %v478
      %v717 = vpop.permute.xlu0 %716
      %720 = vset.pattern.permute.xlu0 0
      %721 = vperm.xlu0 %720, %v479
      %v722 = vpop.permute.xlu0 %721
      %725 = vset.pattern.permute.xlu0 0
      %726 = vperm.xlu0 %725, %v480
      %v727 = vpop.permute.xlu0 %726
      %730 = vset.pattern.permute.xlu0 0
      %731 = vperm.xlu0 %730, %v481
      %v732 = vpop.permute.xlu0 %731
      %735 = vset.pattern.permute.xlu0 0
      %736 = vperm.xlu0 %735, %v482
      %v737 = vpop.permute.xlu0 %736
      %740 = vset.pattern.permute.xlu0 0
      %741 = vperm.xlu0 %740, %v483
      %v742 = vpop.permute.xlu0 %741
      %745 = vset.pattern.permute.xlu0 0
      %746 = vperm.xlu0 %745, %v484
      %v747 = vpop.permute.xlu0 %746
      %750 = vset.pattern.permute.xlu0 0
      %751 = vperm.xlu0 %750, %v485
      %v752 = vpop.permute.xlu0 %751
      %755 = vset.pattern.permute.xlu0 0
      %756 = vperm.xlu0 %755, %v486
      %v757 = vpop.permute.xlu0 %756
      %760 = vset.pattern.permute.xlu0 0
      %761 = vperm.xlu0 %760, %v487
      %v762 = vpop.permute.xlu0 %761
      %765 = vset.pattern.permute.xlu0 0
      %766 = vperm.xlu0 %765, %v488
      %v767 = vpop.permute.xlu0 %766
      %770 = vset.pattern.permute.xlu0 0
      %771 = vperm.xlu0 %770, %v489
      %v772 = vpop.permute.xlu0 %771
      %775 = vset.pattern.permute.xlu0 0
      %776 = vperm.xlu0 %775, %v490
      %v777 = vpop.permute.xlu0 %776
      %780 = vset.pattern.permute.xlu0 0
      %781 = vperm.xlu0 %780, %v491
      %v782 = vpop.permute.xlu0 %781
      %785 = vset.pattern.permute.xlu0 0
      %786 = vperm.xlu0 %785, %v492
      %v787 = vpop.permute.xlu0 %786
      %790 = vset.pattern.permute.xlu0 0
      %791 = vperm.xlu0 %790, %v493
      %v792 = vpop.permute.xlu0 %791
      %795 = vset.pattern.permute.xlu0 0
      %796 = vperm.xlu0 %795, %v494
      %v797 = vpop.permute.xlu0 %796
      %800 = vset.pattern.permute.xlu0 0
      %801 = vperm.xlu0 %800, %v495
      %v802 = vpop.permute.xlu0 %801
      %805 = vset.pattern.permute.xlu0 0
      %806 = vperm.xlu0 %805, %v496
      %v807 = vpop.permute.xlu0 %806
      %810 = vset.pattern.permute.xlu0 0
      %811 = vperm.xlu0 %810, %v497
      %v812 = vpop.permute.xlu0 %811
      %815 = vset.pattern.permute.xlu0 0
      %816 = vperm.xlu0 %815, %v498
      %v817 = vpop.permute.xlu0 %816
      %820 = vset.pattern.permute.xlu0 0
      %821 = vperm.xlu0 %820, %v499
      %v822 = vpop.permute.xlu0 %821
      %825 = vset.pattern.permute.xlu0 0
      %826 = vperm.xlu0 %825, %v500
      %v827 = vpop.permute.xlu0 %826
      %830 = vset.pattern.permute.xlu0 0
      %831 = vperm.xlu0 %830, %v501
      %v832 = vpop.permute.xlu0 %831
      %835 = vset.pattern.permute.xlu0 0
      %836 = vperm.xlu0 %835, %v502
      %v837 = vpop.permute.xlu0 %836
      %840 = vset.pattern.permute.xlu0 0
      %841 = vperm.xlu0 %840, %v503
      %v842 = vpop.permute.xlu0 %841
      %845 = vset.pattern.permute.xlu0 0
      %846 = vperm.xlu0 %845, %v504
      %v847 = vpop.permute.xlu0 %846
      %850 = vset.pattern.permute.xlu0 0
      %851 = vperm.xlu0 %850, %v505
      %v852 = vpop.permute.xlu0 %851
      %855 = vset.pattern.permute.xlu0 0
      %856 = vperm.xlu0 %855, %v506
      %v857 = vpop.permute.xlu0 %856
      %860 = vset.pattern.permute.xlu0 0
      %861 = vperm.xlu0 %860, %v507
      %v862 = vpop.permute.xlu0 %861
      %865 = vset.pattern.permute.xlu0 0
      %866 = vperm.xlu0 %865, %v508
      %v867 = vpop.permute.xlu0 %866
      %870 = vset.pattern.permute.xlu0 0
      %871 = vperm.xlu0 %870, %v509
      %v872 = vpop.permute.xlu0 %871
      %875 = vset.pattern.permute.xlu0 0
      %876 = vperm.xlu0 %875, %v510
      %v877 = vpop.permute.xlu0 %876
      %880 = vset.pattern.permute.xlu0 0
      %881 = vperm.xlu0 %880, %v511
      %v882 = vpop.permute.xlu0 %881
      %885 = vset.pattern.permute.xlu0 0
      %886 = vperm.xlu0 %885, %v512
      %v887 = vpop.permute.xlu0 %886
      %890 = vset.pattern.permute.xlu0 0
      %891 = vperm.xlu0 %890, %v513
      %v892 = vpop.permute.xlu0 %891
      %895 = vset.pattern.permute.xlu0 0
      %896 = vperm.xlu0 %895, %v514
      %v897 = vpop.permute.xlu0 %896
      %900 = vset.pattern.permute.xlu0 0
      %901 = vperm.xlu0 %900, %v515
      %v902 = vpop.permute.xlu0 %901
      %905 = vset.pattern.permute.xlu0 0
      %906 = vperm.xlu0 %905, %v516
      %v907 = vpop.permute.xlu0 %906
      %910 = vset.pattern.permute.xlu0 0
      %911 = vperm.xlu0 %910, %v517
      %v912 = vpop.permute.xlu0 %911
      %915 = vset.pattern.permute.xlu0 0
      %916 = vperm.xlu0 %915, %v518
      %v917 = vpop.permute.xlu0 %916
      %920 = vset.pattern.permute.xlu0 0
      %921 = vperm.xlu0 %920, %v519
      %v922 = vpop.permute.xlu0 %921
      %925 = vset.pattern.permute.xlu0 0
      %926 = vperm.xlu0 %925, %v520
      %v927 = vpop.permute.xlu0 %926
      %930 = vset.pattern.permute.xlu0 0
      %931 = vperm.xlu0 %930, %v521
      %v932 = vpop.permute.xlu0 %931
      %935 = vset.pattern.permute.xlu0 0
      %936 = vperm.xlu0 %935, %v522
      %v937 = vpop.permute.xlu0 %936
      %940 = vset.pattern.permute.xlu0 0
      %941 = vperm.xlu0 %940, %v523
      %v942 = vpop.permute.xlu0 %941
      %945 = vset.pattern.permute.xlu0 0
      %946 = vperm.xlu0 %945, %v524
      %v947 = vpop.permute.xlu0 %946
      %950 = vset.pattern.permute.xlu0 0
      %951 = vperm.xlu0 %950, %v525
      %v952 = vpop.permute.xlu0 %951
      %955 = vset.pattern.permute.xlu0 0
      %956 = vperm.xlu0 %955, %v526
      %v957 = vpop.permute.xlu0 %956
      %960 = vset.pattern.permute.xlu0 0
      %961 = vperm.xlu0 %960, %v527
      %v962 = vpop.permute.xlu0 %961
      %965 = vset.pattern.permute.xlu0 0
      %966 = vperm.xlu0 %965, %v528
      %v967 = vpop.permute.xlu0 %966
      %v1057 = vunpack.c.l.b16 %v349
      %v1058 = vunpack.c.l.b16 %v350
      %v1059 = vunpack.c.l.b16 %v351
      %v1060 = vunpack.c.l.b16 %v352
      %v1061 = vunpack.c.l.b16 %v353
      %v1062 = vunpack.c.l.b16 %v354
      %v1063 = vunpack.c.l.b16 %v355
      %v1064 = vunpack.c.l.b16 %v356
      %v1065 = vunpack.c.l.b16 %v357
      %v1066 = vunpack.c.l.b16 %v358
      %v1067 = vunpack.c.l.b16 %v359
      %v1068 = vunpack.c.l.b16 %v360
      %v1069 = vunpack.c.l.b16 %v361
      %v1070 = vunpack.c.l.b16 %v362
      %v1071 = vunpack.c.l.b16 %v363
      %v1072 = vunpack.c.l.b16 %v364
      %v1073 = vunpack.c.l.b16 %v365
      %v1074 = vunpack.c.l.b16 %v366
      %v1075 = vunpack.c.l.b16 %v367
      %v1076 = vunpack.c.l.b16 %v368
      %v1077 = vunpack.c.l.b16 %v369
      %v1078 = vunpack.c.l.b16 %v370
      %v1079 = vunpack.c.l.b16 %v371
      %v1080 = vunpack.c.l.b16 %v372
      %v1081 = vunpack.c.l.b16 %v373
      %v1082 = vunpack.c.l.b16 %v374
      %v1083 = vunpack.c.l.b16 %v375
      %v1084 = vunpack.c.l.b16 %v376
      %v1085 = vunpack.c.l.b16 %v377
      %v1086 = vunpack.c.l.b16 %v378
      %v1087 = vunpack.c.l.b16 %v379
      %v1088 = vunpack.c.l.b16 %v380
      %v1089 = vunpack.c.l.b16 %v381
      %v1090 = vunpack.c.l.b16 %v382
      %v1091 = vunpack.c.l.b16 %v383
      %v1092 = vunpack.c.l.b16 %v384
      %v1093 = vunpack.c.l.b16 %v385
      %v1094 = vunpack.c.l.b16 %v386
      %v1095 = vunpack.c.l.b16 %v387
      %v1096 = vunpack.c.l.b16 %v388
      %v1097 = vunpack.c.l.b16 %v389
      %v1098 = vunpack.c.l.b16 %v390
      %v1099 = vunpack.c.l.b16 %v391
      %v1100 = vunpack.c.l.b16 %v392
      %v1101 = vunpack.c.l.b16 %v393
      %v1102 = vunpack.c.l.b16 %v394
      %v1103 = vunpack.c.l.b16 %v395
      %v1104 = vunpack.c.l.b16 %v396
      %v1105 = vunpack.c.l.b16 %v397
      %v1106 = vunpack.c.l.b16 %v398
      %v1107 = vunpack.c.l.b16 %v399
      %v1108 = vunpack.c.l.b16 %v400
      %v1109 = vunpack.c.l.b16 %v401
      %v1110 = vunpack.c.l.b16 %v402
      %v1111 = vunpack.c.l.b16 %v403
      %v1112 = vunpack.c.l.b16 %v404
      %v1113 = vunpack.c.l.b16 %v405
      %v1114 = vunpack.c.l.b16 %v406
      %v1115 = vunpack.c.l.b16 %v407
      %v1116 = vunpack.c.l.b16 %v408
      %v1117 = vunpack.c.l.b16 %v409
      %v1118 = vunpack.c.l.b16 %v410
      %v1119 = vunpack.c.l.b16 %v411
      %v1120 = vunpack.c.l.b16 %v412
      %v1121 = vunpack.c.l.b16 %v413
      %v1122 = vunpack.c.l.b16 %v414
      %v1123 = vunpack.c.l.b16 %v415
      %v1124 = vunpack.c.l.b16 %v416
      %v1125 = vunpack.c.l.b16 %v417
      %v1126 = vunpack.c.l.b16 %v418
      %v1127 = vunpack.c.l.b16 %v419
      %v1128 = vunpack.c.l.b16 %v420
      %v1129 = vunpack.c.l.b16 %v421
      %v1130 = vunpack.c.l.b16 %v422
      %v1131 = vunpack.c.l.b16 %v423
      %v1132 = vunpack.c.l.b16 %v424
      %v1133 = vunpack.c.l.b16 %v425
      %v1134 = vunpack.c.l.b16 %v426
      %v1135 = vunpack.c.l.b16 %v427
      %v1136 = vunpack.c.l.b16 %v428
      %v1137 = vunpack.c.l.b16 %v429
      %v1138 = vunpack.c.l.b16 %v430
      %v1139 = vunpack.c.l.b16 %v431
      %v1140 = vunpack.c.l.b16 %v432
      %v1141 = vunpack.c.l.b16 %v433
      %v1142 = vunpack.c.l.b16 %v434
      %v1143 = vunpack.c.l.b16 %v435
      %v1144 = vunpack.c.l.b16 %v436
      %v1145 = vpack.c.b16 %v1058, %v1057
      %v1146 = vpack.c.b16 %v1060, %v1059
      %v1147 = vpack.c.b16 %v1062, %v1061
      %v1148 = vpack.c.b16 %v1064, %v1063
      %v1149 = vpack.c.b16 %v1066, %v1065
      %v1150 = vpack.c.b16 %v1068, %v1067
      %v1151 = vpack.c.b16 %v1070, %v1069
      %v1152 = vpack.c.b16 %v1072, %v1071
      %v1153 = vpack.c.b16 %v1074, %v1073
      %v1154 = vpack.c.b16 %v1076, %v1075
      %v1155 = vpack.c.b16 %v1078, %v1077
      %v1156 = vpack.c.b16 %v1080, %v1079
      %v1157 = vpack.c.b16 %v1082, %v1081
      %v1158 = vpack.c.b16 %v1084, %v1083
      %v1159 = vpack.c.b16 %v1086, %v1085
      %v1160 = vpack.c.b16 %v1088, %v1087
      %v1161 = vpack.c.b16 %v1090, %v1089
      %v1162 = vpack.c.b16 %v1092, %v1091
      %v1163 = vpack.c.b16 %v1094, %v1093
      %v1164 = vpack.c.b16 %v1096, %v1095
      %v1165 = vpack.c.b16 %v1098, %v1097
      %v1166 = vpack.c.b16 %v1100, %v1099
      %v1167 = vpack.c.b16 %v1102, %v1101
      %v1168 = vpack.c.b16 %v1104, %v1103
      %v1169 = vpack.c.b16 %v1106, %v1105
      %v1170 = vpack.c.b16 %v1108, %v1107
      %v1171 = vpack.c.b16 %v1110, %v1109
      %v1172 = vpack.c.b16 %v1112, %v1111
      %v1173 = vpack.c.b16 %v1114, %v1113
      %v1174 = vpack.c.b16 %v1116, %v1115
      %v1175 = vpack.c.b16 %v1118, %v1117
      %v1176 = vpack.c.b16 %v1120, %v1119
      %v1177 = vpack.c.b16 %v1122, %v1121
      %v1178 = vpack.c.b16 %v1124, %v1123
      %v1179 = vpack.c.b16 %v1126, %v1125
      %v1180 = vpack.c.b16 %v1128, %v1127
      %v1181 = vpack.c.b16 %v1130, %v1129
      %v1182 = vpack.c.b16 %v1132, %v1131
      %v1183 = vpack.c.b16 %v1134, %v1133
      %v1184 = vpack.c.b16 %v1136, %v1135
      %v1185 = vpack.c.b16 %v1138, %v1137
      %v1186 = vpack.c.b16 %v1140, %v1139
      %v1187 = vpack.c.b16 %v1142, %v1141
      %v1188 = vpack.c.b16 %v1144, %v1143
      %vm1189 = vcmask 261120
      %v1191 = vsel %vm1189, %v1145, 0
      %v1194 = vsel %vm1189, %v1146, 0
      %v1197 = vsel %vm1189, %v1147, 0
      %v1200 = vsel %vm1189, %v1148, 0
      %v1203 = vsel %vm1189, %v1149, 0
      %v1206 = vsel %vm1189, %v1150, 0
      %v1209 = vsel %vm1189, %v1151, 0
      %v1212 = vsel %vm1189, %v1152, 0
      %v1215 = vsel %vm1189, %v1153, 0
      %v1218 = vsel %vm1189, %v1154, 0
      %v1221 = vsel %vm1189, %v1155, 0
      %v1224 = vsel %vm1189, %v1156, 0
      %v1227 = vsel %vm1189, %v1157, 0
      %v1230 = vsel %vm1189, %v1158, 0
      %v1233 = vsel %vm1189, %v1159, 0
      %v1236 = vsel %vm1189, %v1160, 0
      %v1239 = vsel %vm1189, %v1161, 0
      %v1242 = vsel %vm1189, %v1162, 0
      %v1245 = vsel %vm1189, %v1163, 0
      %v1248 = vsel %vm1189, %v1164, 0
      %v1251 = vsel %vm1189, %v1165, 0
      %v1254 = vsel %vm1189, %v1166, 0
      %v1257 = vsel %vm1189, %v1167, 0
      %v1260 = vsel %vm1189, %v1168, 0
      %v1263 = vsel %vm1189, %v1169, 0
      %v1266 = vsel %vm1189, %v1170, 0
      %v1269 = vsel %vm1189, %v1171, 0
      %v1272 = vsel %vm1189, %v1172, 0
      %v1275 = vsel %vm1189, %v1173, 0
      %v1278 = vsel %vm1189, %v1174, 0
      %v1281 = vsel %vm1189, %v1175, 0
      %v1284 = vsel %vm1189, %v1176, 0
      %v1287 = vsel %vm1189, %v1177, 0
      %v1290 = vsel %vm1189, %v1178, 0
      %v1293 = vsel %vm1189, %v1179, 0
      %v1296 = vsel %vm1189, %v1180, 0
      %v1299 = vsel %vm1189, %v1181, 0
      %v1302 = vsel %vm1189, %v1182, 0
      %v1305 = vsel %vm1189, %v1183, 0
      %v1308 = vsel %vm1189, %v1184, 0
      %v1311 = vsel %vm1189, %v1185, 0
      %v1314 = vsel %vm1189, %v1186, 0
      %v1317 = vsel %vm1189, %v1187, 0
      %v1320 = vsel %vm1189, %v1188, 0
      %1322 = vmatpush.bf16.msra.mxu0 0
      %1323 = vmatpush.bf16.msra.mxu0 0
      %1324 = vmatpush.bf16.msra.mxu0 0
      %1325 = vmatpush.bf16.msra.mxu0 0
      %1326 = vmatpush.bf16.msra.mxu0 0
      %1327 = vmatpush.bf16.msra.mxu0 0
      %1328 = vmatpush.bf16.msra.mxu0 %v439
      %1329 = vmatpush.bf16.msra.mxu0 %v437
      %1330 = vmatmul.bf16.gmra.mxu0 %v1191
      %v1331 = vpop.f32.mrf.mxu0
      %v1332 = vadd.f32 %v532, %v1331
      %v1333 = vpop.f32.mrf.mxu0
      %v1334 = vadd.f32 %v537, %v1333
      %1335 = vmatmul.bf16.gmra.mxu0 %v1194
      %v1336 = vpop.f32.mrf.mxu0
      %v1337 = vadd.f32 %v542, %v1336
      %v1338 = vpop.f32.mrf.mxu0
      %v1339 = vadd.f32 %v547, %v1338
      %1340 = vmatmul.bf16.gmra.mxu0 %v1197
      %v1341 = vpop.f32.mrf.mxu0
      %v1342 = vadd.f32 %v552, %v1341
      %v1343 = vpop.f32.mrf.mxu0
      %v1344 = vadd.f32 %v557, %v1343
      %1345 = vmatmul.bf16.gmra.mxu0 %v1200
      %v1346 = vpop.f32.mrf.mxu0
      %v1347 = vadd.f32 %v562, %v1346
      %v1348 = vpop.f32.mrf.mxu0
      %v1349 = vadd.f32 %v567, %v1348
      %1350 = vmatmul.bf16.gmra.mxu0 %v1203
      %v1351 = vpop.f32.mrf.mxu0
      %v1352 = vadd.f32 %v572, %v1351
      %v1353 = vpop.f32.mrf.mxu0
      %v1354 = vadd.f32 %v577, %v1353
      %1355 = vmatmul.bf16.gmra.mxu0 %v1206
      %v1356 = vpop.f32.mrf.mxu0
      %v1357 = vadd.f32 %v582, %v1356
      %v1358 = vpop.f32.mrf.mxu0
      %v1359 = vadd.f32 %v587, %v1358
      %1360 = vmatmul.bf16.gmra.mxu0 %v1209
      %v1361 = vpop.f32.mrf.mxu0
      %v1362 = vadd.f32 %v592, %v1361
      %v1363 = vpop.f32.mrf.mxu0
      %v1364 = vadd.f32 %v597, %v1363
      %1365 = vmatmul.bf16.gmra.mxu0 %v1212
      %v1366 = vpop.f32.mrf.mxu0
      %v1367 = vadd.f32 %v602, %v1366
      %v1368 = vpop.f32.mrf.mxu0
      %v1369 = vadd.f32 %v607, %v1368
      %1370 = vmatmul.bf16.gmra.mxu0 %v1215
      %v1371 = vpop.f32.mrf.mxu0
      %v1372 = vadd.f32 %v612, %v1371
      %v1373 = vpop.f32.mrf.mxu0
      %v1374 = vadd.f32 %v617, %v1373
      %1375 = vmatmul.bf16.gmra.mxu0 %v1218
      %v1376 = vpop.f32.mrf.mxu0
      %v1377 = vadd.f32 %v622, %v1376
      %v1378 = vpop.f32.mrf.mxu0
      %v1379 = vadd.f32 %v627, %v1378
      %1380 = vmatmul.bf16.gmra.mxu0 %v1221
      %v1381 = vpop.f32.mrf.mxu0
      %v1382 = vadd.f32 %v632, %v1381
      %v1383 = vpop.f32.mrf.mxu0
      %v1384 = vadd.f32 %v637, %v1383
      %1385 = vmatmul.bf16.gmra.mxu0 %v1224
      %v1386 = vpop.f32.mrf.mxu0
      %v1387 = vadd.f32 %v642, %v1386
      %v1388 = vpop.f32.mrf.mxu0
      %v1389 = vadd.f32 %v647, %v1388
      %1390 = vmatmul.bf16.gmra.mxu0 %v1227
      %v1391 = vpop.f32.mrf.mxu0
      %v1392 = vadd.f32 %v652, %v1391
      %v1393 = vpop.f32.mrf.mxu0
      %v1394 = vadd.f32 %v657, %v1393
      %1395 = vmatmul.bf16.gmra.mxu0 %v1230
      %v1396 = vpop.f32.mrf.mxu0
      %v1397 = vadd.f32 %v662, %v1396
      %v1398 = vpop.f32.mrf.mxu0
      %v1399 = vadd.f32 %v667, %v1398
      %1400 = vmatmul.bf16.gmra.mxu0 %v1233
      %v1401 = vpop.f32.mrf.mxu0
      %v1402 = vadd.f32 %v672, %v1401
      %v1403 = vpop.f32.mrf.mxu0
      %v1404 = vadd.f32 %v677, %v1403
      %1405 = vmatmul.bf16.gmra.mxu0 %v1236
      %v1406 = vpop.f32.mrf.mxu0
      %v1407 = vadd.f32 %v682, %v1406
      %v1408 = vpop.f32.mrf.mxu0
      %v1409 = vadd.f32 %v687, %v1408
      %1410 = vmatmul.bf16.gmra.mxu0 %v1239
      %v1411 = vpop.f32.mrf.mxu0
      %v1412 = vadd.f32 %v692, %v1411
      %v1413 = vpop.f32.mrf.mxu0
      %v1414 = vadd.f32 %v697, %v1413
      %1415 = vmatmul.bf16.gmra.mxu0 %v1242
      %v1416 = vpop.f32.mrf.mxu0
      %v1417 = vadd.f32 %v702, %v1416
      %v1418 = vpop.f32.mrf.mxu0
      %v1419 = vadd.f32 %v707, %v1418
      %1420 = vmatmul.bf16.gmra.mxu0 %v1245
      %v1421 = vpop.f32.mrf.mxu0
      %v1422 = vadd.f32 %v712, %v1421
      %v1423 = vpop.f32.mrf.mxu0
      %v1424 = vadd.f32 %v717, %v1423
      %1425 = vmatmul.bf16.gmra.mxu0 %v1248
      %v1426 = vpop.f32.mrf.mxu0
      %v1427 = vadd.f32 %v722, %v1426
      %v1428 = vpop.f32.mrf.mxu0
      %v1429 = vadd.f32 %v727, %v1428
      %1430 = vmatmul.bf16.gmra.mxu0 %v1251
      %v1431 = vpop.f32.mrf.mxu0
      %v1432 = vadd.f32 %v732, %v1431
      %v1433 = vpop.f32.mrf.mxu0
      %v1434 = vadd.f32 %v737, %v1433
      %1435 = vmatmul.bf16.gmra.mxu0 %v1254
      %v1436 = vpop.f32.mrf.mxu0
      %v1437 = vadd.f32 %v742, %v1436
      %v1438 = vpop.f32.mrf.mxu0
      %v1439 = vadd.f32 %v747, %v1438
      %1440 = vmatmul.bf16.gmra.mxu0 %v1257
      %v1441 = vpop.f32.mrf.mxu0
      %v1442 = vadd.f32 %v752, %v1441
      %v1443 = vpop.f32.mrf.mxu0
      %v1444 = vadd.f32 %v757, %v1443
      %1445 = vmatmul.bf16.gmra.mxu0 %v1260
      %v1446 = vpop.f32.mrf.mxu0
      %v1447 = vadd.f32 %v762, %v1446
      %v1448 = vpop.f32.mrf.mxu0
      %v1449 = vadd.f32 %v767, %v1448
      %1450 = vmatmul.bf16.gmra.mxu0 %v1263
      %v1451 = vpop.f32.mrf.mxu0
      %v1452 = vadd.f32 %v772, %v1451
      %v1453 = vpop.f32.mrf.mxu0
      %v1454 = vadd.f32 %v777, %v1453
      %1455 = vmatmul.bf16.gmra.mxu0 %v1266
      %v1456 = vpop.f32.mrf.mxu0
      %v1457 = vadd.f32 %v782, %v1456
      %v1458 = vpop.f32.mrf.mxu0
      %v1459 = vadd.f32 %v787, %v1458
      %1460 = vmatmul.bf16.gmra.mxu0 %v1269
      %v1461 = vpop.f32.mrf.mxu0
      %v1462 = vadd.f32 %v792, %v1461
      %v1463 = vpop.f32.mrf.mxu0
      %v1464 = vadd.f32 %v797, %v1463
      %1465 = vmatmul.bf16.gmra.mxu0 %v1272
      %v1466 = vpop.f32.mrf.mxu0
      %v1467 = vadd.f32 %v802, %v1466
      %v1468 = vpop.f32.mrf.mxu0
      %v1469 = vadd.f32 %v807, %v1468
      %1470 = vmatmul.bf16.gmra.mxu0 %v1275
      %v1471 = vpop.f32.mrf.mxu0
      %v1472 = vadd.f32 %v812, %v1471
      %v1473 = vpop.f32.mrf.mxu0
      %v1474 = vadd.f32 %v817, %v1473
      %1475 = vmatmul.bf16.gmra.mxu0 %v1278
      %v1476 = vpop.f32.mrf.mxu0
      %v1477 = vadd.f32 %v822, %v1476
      %v1478 = vpop.f32.mrf.mxu0
      %v1479 = vadd.f32 %v827, %v1478
      %1480 = vmatmul.bf16.gmra.mxu0 %v1281
      %v1481 = vpop.f32.mrf.mxu0
      %v1482 = vadd.f32 %v832, %v1481
      %v1483 = vpop.f32.mrf.mxu0
      %v1484 = vadd.f32 %v837, %v1483
      %1485 = vmatmul.bf16.gmra.mxu0 %v1284
      %v1486 = vpop.f32.mrf.mxu0
      %v1487 = vadd.f32 %v842, %v1486
      %v1488 = vpop.f32.mrf.mxu0
      %v1489 = vadd.f32 %v847, %v1488
      %1490 = vmatmul.bf16.gmra.mxu0 %v1287
      %v1491 = vpop.f32.mrf.mxu0
      %v1492 = vadd.f32 %v852, %v1491
      %v1493 = vpop.f32.mrf.mxu0
      %v1494 = vadd.f32 %v857, %v1493
      %1495 = vmatmul.bf16.gmra.mxu0 %v1290
      %v1496 = vpop.f32.mrf.mxu0
      %v1497 = vadd.f32 %v862, %v1496
      %v1498 = vpop.f32.mrf.mxu0
      %v1499 = vadd.f32 %v867, %v1498
      %1500 = vmatmul.bf16.gmra.mxu0 %v1293
      %v1501 = vpop.f32.mrf.mxu0
      %v1502 = vadd.f32 %v872, %v1501
      %v1503 = vpop.f32.mrf.mxu0
      %v1504 = vadd.f32 %v877, %v1503
      %1505 = vmatmul.bf16.gmra.mxu0 %v1296
      %v1506 = vpop.f32.mrf.mxu0
      %v1507 = vadd.f32 %v882, %v1506
      %v1508 = vpop.f32.mrf.mxu0
      %v1509 = vadd.f32 %v887, %v1508
      %1510 = vmatmul.bf16.gmra.mxu0 %v1299
      %v1511 = vpop.f32.mrf.mxu0
      %v1512 = vadd.f32 %v892, %v1511
      %v1513 = vpop.f32.mrf.mxu0
      %v1514 = vadd.f32 %v897, %v1513
      %1515 = vmatmul.bf16.gmra.mxu0 %v1302
      %v1516 = vpop.f32.mrf.mxu0
      %v1517 = vadd.f32 %v902, %v1516
      %v1518 = vpop.f32.mrf.mxu0
      %v1519 = vadd.f32 %v907, %v1518
      %1520 = vmatmul.bf16.gmra.mxu0 %v1305
      %v1521 = vpop.f32.mrf.mxu0
      %v1522 = vadd.f32 %v912, %v1521
      %v1523 = vpop.f32.mrf.mxu0
      %v1524 = vadd.f32 %v917, %v1523
      %1525 = vmatmul.bf16.gmra.mxu0 %v1308
      %v1526 = vpop.f32.mrf.mxu0
      %v1527 = vadd.f32 %v922, %v1526
      %v1528 = vpop.f32.mrf.mxu0
      %v1529 = vadd.f32 %v927, %v1528
      %1530 = vmatmul.bf16.gmra.mxu0 %v1311
      %v1531 = vpop.f32.mrf.mxu0
      %v1532 = vadd.f32 %v932, %v1531
      %v1533 = vpop.f32.mrf.mxu0
      %v1534 = vadd.f32 %v937, %v1533
      %1535 = vmatmul.bf16.gmra.mxu0 %v1314
      %v1536 = vpop.f32.mrf.mxu0
      %v1537 = vadd.f32 %v942, %v1536
      %v1538 = vpop.f32.mrf.mxu0
      %v1539 = vadd.f32 %v947, %v1538
      %1540 = vmatmul.bf16.gmra.mxu0 %v1317
      %v1541 = vpop.f32.mrf.mxu0
      %v1542 = vadd.f32 %v952, %v1541
      %v1543 = vpop.f32.mrf.mxu0
      %v1544 = vadd.f32 %v957, %v1543
      %1545 = vmatmul.bf16.gmra.mxu0 %v1320
      %v1546 = vpop.f32.mrf.mxu0
      %v1547 = vadd.f32 %v962, %v1546
      %v1548 = vpop.f32.mrf.mxu0
      %v1549 = vadd.f32 %v967, %v1548
      %1550 = vdwg.mxu0
      %1551 = vmatpush.bf16.msra.mxu0 0
      %1552 = vmatpush.bf16.msra.mxu0 0
      %1553 = vmatpush.bf16.msra.mxu0 0
      %1554 = vmatpush.bf16.msra.mxu0 0
      %1555 = vmatpush.bf16.msra.mxu0 0
      %1556 = vmatpush.bf16.msra.mxu0 0
      %1557 = vmatpush.bf16.msra.mxu0 %v440
      %1558 = vmatpush.bf16.msra.mxu0 %v438
      %1559 = vmatmul.bf16.gmra.mxu0 %v1191
      %v1560 = vpop.f32.mrf.mxu0
      %v1561 = vadd.f32 %v532, %v1560
      %v1562 = vpop.f32.mrf.mxu0
      %v1563 = vadd.f32 %v537, %v1562
      %1564 = vmatmul.bf16.gmra.mxu0 %v1194
      %v1565 = vpop.f32.mrf.mxu0
      %v1566 = vadd.f32 %v542, %v1565
      %v1567 = vpop.f32.mrf.mxu0
      %v1568 = vadd.f32 %v547, %v1567
      %1569 = vmatmul.bf16.gmra.mxu0 %v1197
      %v1570 = vpop.f32.mrf.mxu0
      %v1571 = vadd.f32 %v552, %v1570
      %v1572 = vpop.f32.mrf.mxu0
      %v1573 = vadd.f32 %v557, %v1572
      %1574 = vmatmul.bf16.gmra.mxu0 %v1200
      %v1575 = vpop.f32.mrf.mxu0
      %v1576 = vadd.f32 %v562, %v1575
      %v1577 = vpop.f32.mrf.mxu0
      %v1578 = vadd.f32 %v567, %v1577
      %1579 = vmatmul.bf16.gmra.mxu0 %v1203
      %v1580 = vpop.f32.mrf.mxu0
      %v1581 = vadd.f32 %v572, %v1580
      %v1582 = vpop.f32.mrf.mxu0
      %v1583 = vadd.f32 %v577, %v1582
      %1584 = vmatmul.bf16.gmra.mxu0 %v1206
      %v1585 = vpop.f32.mrf.mxu0
      %v1586 = vadd.f32 %v582, %v1585
      %v1587 = vpop.f32.mrf.mxu0
      %v1588 = vadd.f32 %v587, %v1587
      %1589 = vmatmul.bf16.gmra.mxu0 %v1209
      %v1590 = vpop.f32.mrf.mxu0
      %v1591 = vadd.f32 %v592, %v1590
      %v1592 = vpop.f32.mrf.mxu0
      %v1593 = vadd.f32 %v597, %v1592
      %1594 = vmatmul.bf16.gmra.mxu0 %v1212
      %v1595 = vpop.f32.mrf.mxu0
      %v1596 = vadd.f32 %v602, %v1595
      %v1597 = vpop.f32.mrf.mxu0
      %v1598 = vadd.f32 %v607, %v1597
      %1599 = vmatmul.bf16.gmra.mxu0 %v1215
      %v1600 = vpop.f32.mrf.mxu0
      %v1601 = vadd.f32 %v612, %v1600
      %v1602 = vpop.f32.mrf.mxu0
      %v1603 = vadd.f32 %v617, %v1602
      %1604 = vmatmul.bf16.gmra.mxu0 %v1218
      %v1605 = vpop.f32.mrf.mxu0
      %v1606 = vadd.f32 %v622, %v1605
      %v1607 = vpop.f32.mrf.mxu0
      %v1608 = vadd.f32 %v627, %v1607
      %1609 = vmatmul.bf16.gmra.mxu0 %v1221
      %v1610 = vpop.f32.mrf.mxu0
      %v1611 = vadd.f32 %v632, %v1610
      %v1612 = vpop.f32.mrf.mxu0
      %v1613 = vadd.f32 %v637, %v1612
      %1614 = vmatmul.bf16.gmra.mxu0 %v1224
      %v1615 = vpop.f32.mrf.mxu0
      %v1616 = vadd.f32 %v642, %v1615
      %v1617 = vpop.f32.mrf.mxu0
      %v1618 = vadd.f32 %v647, %v1617
      %1619 = vmatmul.bf16.gmra.mxu0 %v1227
      %v1620 = vpop.f32.mrf.mxu0
      %v1621 = vadd.f32 %v652, %v1620
      %v1622 = vpop.f32.mrf.mxu0
      %v1623 = vadd.f32 %v657, %v1622
      %1624 = vmatmul.bf16.gmra.mxu0 %v1230
      %v1625 = vpop.f32.mrf.mxu0
      %v1626 = vadd.f32 %v662, %v1625
      %v1627 = vpop.f32.mrf.mxu0
      %v1628 = vadd.f32 %v667, %v1627
      %1629 = vmatmul.bf16.gmra.mxu0 %v1233
      %v1630 = vpop.f32.mrf.mxu0
      %v1631 = vadd.f32 %v672, %v1630
      %v1632 = vpop.f32.mrf.mxu0
      %v1633 = vadd.f32 %v677, %v1632
      %1634 = vmatmul.bf16.gmra.mxu0 %v1236
      %v1635 = vpop.f32.mrf.mxu0
      %v1636 = vadd.f32 %v682, %v1635
      %v1637 = vpop.f32.mrf.mxu0
      %v1638 = vadd.f32 %v687, %v1637
      %1639 = vmatmul.bf16.gmra.mxu0 %v1239
      %v1640 = vpop.f32.mrf.mxu0
      %v1641 = vadd.f32 %v692, %v1640
      %v1642 = vpop.f32.mrf.mxu0
      %v1643 = vadd.f32 %v697, %v1642
      %1644 = vmatmul.bf16.gmra.mxu0 %v1242
      %v1645 = vpop.f32.mrf.mxu0
      %v1646 = vadd.f32 %v702, %v1645
      %v1647 = vpop.f32.mrf.mxu0
      %v1648 = vadd.f32 %v707, %v1647
      %1649 = vmatmul.bf16.gmra.mxu0 %v1245
      %v1650 = vpop.f32.mrf.mxu0
      %v1651 = vadd.f32 %v712, %v1650
      %v1652 = vpop.f32.mrf.mxu0
      %v1653 = vadd.f32 %v717, %v1652
      %1654 = vmatmul.bf16.gmra.mxu0 %v1248
      %v1655 = vpop.f32.mrf.mxu0
      %v1656 = vadd.f32 %v722, %v1655
      %v1657 = vpop.f32.mrf.mxu0
      %v1658 = vadd.f32 %v727, %v1657
      %1659 = vmatmul.bf16.gmra.mxu0 %v1251
      %v1660 = vpop.f32.mrf.mxu0
      %v1661 = vadd.f32 %v732, %v1660
      %v1662 = vpop.f32.mrf.mxu0
      %v1663 = vadd.f32 %v737, %v1662
      %1664 = vmatmul.bf16.gmra.mxu0 %v1254
      %v1665 = vpop.f32.mrf.mxu0
      %v1666 = vadd.f32 %v742, %v1665
      %v1667 = vpop.f32.mrf.mxu0
      %v1668 = vadd.f32 %v747, %v1667
      %1669 = vmatmul.bf16.gmra.mxu0 %v1257
      %v1670 = vpop.f32.mrf.mxu0
      %v1671 = vadd.f32 %v752, %v1670
      %v1672 = vpop.f32.mrf.mxu0
      %v1673 = vadd.f32 %v757, %v1672
      %1674 = vmatmul.bf16.gmra.mxu0 %v1260
      %v1675 = vpop.f32.mrf.mxu0
      %v1676 = vadd.f32 %v762, %v1675
      %v1677 = vpop.f32.mrf.mxu0
      %v1678 = vadd.f32 %v767, %v1677
      %1679 = vmatmul.bf16.gmra.mxu0 %v1263
      %v1680 = vpop.f32.mrf.mxu0
      %v1681 = vadd.f32 %v772, %v1680
      %v1682 = vpop.f32.mrf.mxu0
      %v1683 = vadd.f32 %v777, %v1682
      %1684 = vmatmul.bf16.gmra.mxu0 %v1266
      %v1685 = vpop.f32.mrf.mxu0
      %v1686 = vadd.f32 %v782, %v1685
      %v1687 = vpop.f32.mrf.mxu0
      %v1688 = vadd.f32 %v787, %v1687
      %1689 = vmatmul.bf16.gmra.mxu0 %v1269
      %v1690 = vpop.f32.mrf.mxu0
      %v1691 = vadd.f32 %v792, %v1690
      %v1692 = vpop.f32.mrf.mxu0
      %v1693 = vadd.f32 %v797, %v1692
      %1694 = vmatmul.bf16.gmra.mxu0 %v1272
      %v1695 = vpop.f32.mrf.mxu0
      %v1696 = vadd.f32 %v802, %v1695
      %v1697 = vpop.f32.mrf.mxu0
      %v1698 = vadd.f32 %v807, %v1697
      %1699 = vmatmul.bf16.gmra.mxu0 %v1275
      %v1700 = vpop.f32.mrf.mxu0
      %v1701 = vadd.f32 %v812, %v1700
      %v1702 = vpop.f32.mrf.mxu0
      %v1703 = vadd.f32 %v817, %v1702
      %1704 = vmatmul.bf16.gmra.mxu0 %v1278
      %v1705 = vpop.f32.mrf.mxu0
      %v1706 = vadd.f32 %v822, %v1705
      %v1707 = vpop.f32.mrf.mxu0
      %v1708 = vadd.f32 %v827, %v1707
      %1709 = vmatmul.bf16.gmra.mxu0 %v1281
      %v1710 = vpop.f32.mrf.mxu0
      %v1711 = vadd.f32 %v832, %v1710
      %v1712 = vpop.f32.mrf.mxu0
      %v1713 = vadd.f32 %v837, %v1712
      %1714 = vmatmul.bf16.gmra.mxu0 %v1284
      %v1715 = vpop.f32.mrf.mxu0
      %v1716 = vadd.f32 %v842, %v1715
      %v1717 = vpop.f32.mrf.mxu0
      %v1718 = vadd.f32 %v847, %v1717
      %1719 = vmatmul.bf16.gmra.mxu0 %v1287
      %v1720 = vpop.f32.mrf.mxu0
      %v1721 = vadd.f32 %v852, %v1720
      %v1722 = vpop.f32.mrf.mxu0
      %v1723 = vadd.f32 %v857, %v1722
      %1724 = vmatmul.bf16.gmra.mxu0 %v1290
      %v1725 = vpop.f32.mrf.mxu0
      %v1726 = vadd.f32 %v862, %v1725
      %v1727 = vpop.f32.mrf.mxu0
      %v1728 = vadd.f32 %v867, %v1727
      %1729 = vmatmul.bf16.gmra.mxu0 %v1293
      %v1730 = vpop.f32.mrf.mxu0
      %v1731 = vadd.f32 %v872, %v1730
      %v1732 = vpop.f32.mrf.mxu0
      %v1733 = vadd.f32 %v877, %v1732
      %1734 = vmatmul.bf16.gmra.mxu0 %v1296
      %v1735 = vpop.f32.mrf.mxu0
      %v1736 = vadd.f32 %v882, %v1735
      %v1737 = vpop.f32.mrf.mxu0
      %v1738 = vadd.f32 %v887, %v1737
      %1739 = vmatmul.bf16.gmra.mxu0 %v1299
      %v1740 = vpop.f32.mrf.mxu0
      %v1741 = vadd.f32 %v892, %v1740
      %v1742 = vpop.f32.mrf.mxu0
      %v1743 = vadd.f32 %v897, %v1742
      %1744 = vmatmul.bf16.gmra.mxu0 %v1302
      %v1745 = vpop.f32.mrf.mxu0
      %v1746 = vadd.f32 %v902, %v1745
      %v1747 = vpop.f32.mrf.mxu0
      %v1748 = vadd.f32 %v907, %v1747
      %1749 = vmatmul.bf16.gmra.mxu0 %v1305
      %v1750 = vpop.f32.mrf.mxu0
      %v1751 = vadd.f32 %v912, %v1750
      %v1752 = vpop.f32.mrf.mxu0
      %v1753 = vadd.f32 %v917, %v1752
      %1754 = vmatmul.bf16.gmra.mxu0 %v1308
      %v1755 = vpop.f32.mrf.mxu0
      %v1756 = vadd.f32 %v922, %v1755
      %v1757 = vpop.f32.mrf.mxu0
      %v1758 = vadd.f32 %v927, %v1757
      %1759 = vmatmul.bf16.gmra.mxu0 %v1311
      %v1760 = vpop.f32.mrf.mxu0
      %v1761 = vadd.f32 %v932, %v1760
      %v1762 = vpop.f32.mrf.mxu0
      %v1763 = vadd.f32 %v937, %v1762
      %1764 = vmatmul.bf16.gmra.mxu0 %v1314
      %v1765 = vpop.f32.mrf.mxu0
      %v1766 = vadd.f32 %v942, %v1765
      %v1767 = vpop.f32.mrf.mxu0
      %v1768 = vadd.f32 %v947, %v1767
      %1769 = vmatmul.bf16.gmra.mxu0 %v1317
      %v1770 = vpop.f32.mrf.mxu0
      %v1771 = vadd.f32 %v952, %v1770
      %v1772 = vpop.f32.mrf.mxu0
      %v1773 = vadd.f32 %v957, %v1772
      %1774 = vmatmul.bf16.gmra.mxu0 %v1320
      %v1775 = vpop.f32.mrf.mxu0
      %v1776 = vadd.f32 %v962, %v1775
      %v1777 = vpop.f32.mrf.mxu0
      %v1778 = vadd.f32 %v967, %v1777
      %1779 = vdwg.mxu0
      %1780 = vst [vmem:[%s262] sm:$0xff] %v1332
      %1781 = vst [vmem:[%s262 + $0x8] sm:$0xff] %v1561
      %1782 = vst [vmem:[%s262 + $0x10] sm:$0xff] %v1334
      %1783 = vst [vmem:[%s262 + $0x18] sm:$0xff] %v1563
      %1784 = vst [vmem:[%s262 + $0x20] sm:$0xff] %v1337
      %1785 = vst [vmem:[%s262 + $0x28] sm:$0xff] %v1566
      %1786 = vst [vmem:[%s262 + $0x30] sm:$0xff] %v1339
      %1787 = vst [vmem:[%s262 + $0x38] sm:$0xff] %v1568
      %1788 = vst [vmem:[%s262 + $0x40] sm:$0xff] %v1342
      %1789 = vst [vmem:[%s262 + $0x48] sm:$0xff] %v1571
      %1790 = vst [vmem:[%s262 + $0x50] sm:$0xff] %v1344
      %1791 = vst [vmem:[%s262 + $0x58] sm:$0xff] %v1573
      %1792 = vst [vmem:[%s262 + $0x60] sm:$0xff] %v1347
      %1793 = vst [vmem:[%s262 + $0x68] sm:$0xff] %v1576
      %1794 = vst [vmem:[%s262 + $0x70] sm:$0xff] %v1349
      %1795 = vst [vmem:[%s262 + $0x78] sm:$0xff] %v1578
      %1796 = vst [vmem:[%s262 + $0x80] sm:$0xff] %v1352
      %1797 = vst [vmem:[%s262 + $0x88] sm:$0xff] %v1581
      %1798 = vst [vmem:[%s262 + $0x90] sm:$0xff] %v1354
      %1799 = vst [vmem:[%s262 + $0x98] sm:$0xff] %v1583
      %1800 = vst [vmem:[%s262 + $0xa0] sm:$0xff] %v1357
      %1801 = vst [vmem:[%s262 + $0xa8] sm:$0xff] %v1586
      %1802 = vst [vmem:[%s262 + $0xb0] sm:$0xff] %v1359
      %1803 = vst [vmem:[%s262 + $0xb8] sm:$0xff] %v1588
      %1804 = vst [vmem:[%s262 + $0xc0] sm:$0xff] %v1362
      %1805 = vst [vmem:[%s262 + $0xc8] sm:$0xff] %v1591
      %1806 = vst [vmem:[%s262 + $0xd0] sm:$0xff] %v1364
      %1807 = vst [vmem:[%s262 + $0xd8] sm:$0xff] %v1593
      %1808 = vst [vmem:[%s262 + $0xe0] sm:$0xff] %v1367
      %1809 = vst [vmem:[%s262 + $0xe8] sm:$0xff] %v1596
      %1810 = vst [vmem:[%s262 + $0xf0] sm:$0xff] %v1369
      %1811 = vst [vmem:[%s262 + $0xf8] sm:$0xff] %v1598
      %1812 = vst [vmem:[%s262 + $0x100] sm:$0xff] %v1372
      %1813 = vst [vmem:[%s262 + $0x108] sm:$0xff] %v1601
      %1814 = vst [vmem:[%s262 + $0x110] sm:$0xff] %v1374
      %1815 = vst [vmem:[%s262 + $0x118] sm:$0xff] %v1603
      %1816 = vst [vmem:[%s262 + $0x120] sm:$0xff] %v1377
      %1817 = vst [vmem:[%s262 + $0x128] sm:$0xff] %v1606
      %1818 = vst [vmem:[%s262 + $0x130] sm:$0xff] %v1379
      %1819 = vst [vmem:[%s262 + $0x138] sm:$0xff] %v1608
      %1820 = vst [vmem:[%s262 + $0x140] sm:$0xff] %v1382
      %1821 = vst [vmem:[%s262 + $0x148] sm:$0xff] %v1611
      %1822 = vst [vmem:[%s262 + $0x150] sm:$0xff] %v1384
      %1823 = vst [vmem:[%s262 + $0x158] sm:$0xff] %v1613
      %1824 = vst [vmem:[%s262 + $0x160] sm:$0xff] %v1387
      %1825 = vst [vmem:[%s262 + $0x168] sm:$0xff] %v1616
      %1826 = vst [vmem:[%s262 + $0x170] sm:$0xff] %v1389
      %1827 = vst [vmem:[%s262 + $0x178] sm:$0xff] %v1618
      %1828 = vst [vmem:[%s262 + $0x180] sm:$0xff] %v1392
      %1829 = vst [vmem:[%s262 + $0x188] sm:$0xff] %v1621
      %1830 = vst [vmem:[%s262 + $0x190] sm:$0xff] %v1394
      %1831 = vst [vmem:[%s262 + $0x198] sm:$0xff] %v1623
      %1832 = vst [vmem:[%s262 + $0x1a0] sm:$0xff] %v1397
      %1833 = vst [vmem:[%s262 + $0x1a8] sm:$0xff] %v1626
      %1834 = vst [vmem:[%s262 + $0x1b0] sm:$0xff] %v1399
      %1835 = vst [vmem:[%s262 + $0x1b8] sm:$0xff] %v1628
      %1836 = vst [vmem:[%s262 + $0x1c0] sm:$0xff] %v1402
      %1837 = vst [vmem:[%s262 + $0x1c8] sm:$0xff] %v1631
      %1838 = vst [vmem:[%s262 + $0x1d0] sm:$0xff] %v1404
      %1839 = vst [vmem:[%s262 + $0x1d8] sm:$0xff] %v1633
      %1840 = vst [vmem:[%s262 + $0x1e0] sm:$0xff] %v1407
      %1841 = vst [vmem:[%s262 + $0x1e8] sm:$0xff] %v1636
      %1842 = vst [vmem:[%s262 + $0x1f0] sm:$0xff] %v1409
      %1843 = vst [vmem:[%s262 + $0x1f8] sm:$0xff] %v1638
      %1844 = vst [vmem:[%s262 + $0x200] sm:$0xff] %v1412
      %1845 = vst [vmem:[%s262 + $0x208] sm:$0xff] %v1641
      %1846 = vst [vmem:[%s262 + $0x210] sm:$0xff] %v1414
      %1847 = vst [vmem:[%s262 + $0x218] sm:$0xff] %v1643
      %1848 = vst [vmem:[%s262 + $0x220] sm:$0xff] %v1417
      %1849 = vst [vmem:[%s262 + $0x228] sm:$0xff] %v1646
      %1850 = vst [vmem:[%s262 + $0x230] sm:$0xff] %v1419
      %1851 = vst [vmem:[%s262 + $0x238] sm:$0xff] %v1648
      %1852 = vst [vmem:[%s262 + $0x240] sm:$0xff] %v1422
      %1853 = vst [vmem:[%s262 + $0x248] sm:$0xff] %v1651
      %1854 = vst [vmem:[%s262 + $0x250] sm:$0xff] %v1424
      %1855 = vst [vmem:[%s262 + $0x258] sm:$0xff] %v1653
      %1856 = vst [vmem:[%s262 + $0x260] sm:$0xff] %v1427
      %1857 = vst [vmem:[%s262 + $0x268] sm:$0xff] %v1656
      %1858 = vst [vmem:[%s262 + $0x270] sm:$0xff] %v1429
      %1859 = vst [vmem:[%s262 + $0x278] sm:$0xff] %v1658
      %1860 = vst [vmem:[%s262 + $0x280] sm:$0xff] %v1432
      %1861 = vst [vmem:[%s262 + $0x288] sm:$0xff] %v1661
      %1862 = vst [vmem:[%s262 + $0x290] sm:$0xff] %v1434
      %1863 = vst [vmem:[%s262 + $0x298] sm:$0xff] %v1663
      %1864 = vst [vmem:[%s262 + $0x2a0] sm:$0xff] %v1437
      %1865 = vst [vmem:[%s262 + $0x2a8] sm:$0xff] %v1666
      %1866 = vst [vmem:[%s262 + $0x2b0] sm:$0xff] %v1439
      %1867 = vst [vmem:[%s262 + $0x2b8] sm:$0xff] %v1668
      %1868 = vst [vmem:[%s262 + $0x2c0] sm:$0xff] %v1442
      %1869 = vst [vmem:[%s262 + $0x2c8] sm:$0xff] %v1671
      %1870 = vst [vmem:[%s262 + $0x2d0] sm:$0xff] %v1444
      %1871 = vst [vmem:[%s262 + $0x2d8] sm:$0xff] %v1673
      %1872 = vst [vmem:[%s262 + $0x2e0] sm:$0xff] %v1447
      %1873 = vst [vmem:[%s262 + $0x2e8] sm:$0xff] %v1676
      %1874 = vst [vmem:[%s262 + $0x2f0] sm:$0xff] %v1449
      %1875 = vst [vmem:[%s262 + $0x2f8] sm:$0xff] %v1678
      %1876 = vst [vmem:[%s262 + $0x300] sm:$0xff] %v1452
      %1877 = vst [vmem:[%s262 + $0x308] sm:$0xff] %v1681
      %1878 = vst [vmem:[%s262 + $0x310] sm:$0xff] %v1454
      %1879 = vst [vmem:[%s262 + $0x318] sm:$0xff] %v1683
      %1880 = vst [vmem:[%s262 + $0x320] sm:$0xff] %v1457
      %1881 = vst [vmem:[%s262 + $0x328] sm:$0xff] %v1686
      %1882 = vst [vmem:[%s262 + $0x330] sm:$0xff] %v1459
      %1883 = vst [vmem:[%s262 + $0x338] sm:$0xff] %v1688
      %1884 = vst [vmem:[%s262 + $0x340] sm:$0xff] %v1462
      %1885 = vst [vmem:[%s262 + $0x348] sm:$0xff] %v1691
      %1886 = vst [vmem:[%s262 + $0x350] sm:$0xff] %v1464
      %1887 = vst [vmem:[%s262 + $0x358] sm:$0xff] %v1693
      %1888 = vst [vmem:[%s262 + $0x360] sm:$0xff] %v1467
      %1889 = vst [vmem:[%s262 + $0x368] sm:$0xff] %v1696
      %1890 = vst [vmem:[%s262 + $0x370] sm:$0xff] %v1469
      %1891 = vst [vmem:[%s262 + $0x378] sm:$0xff] %v1698
      %1892 = vst [vmem:[%s262 + $0x380] sm:$0xff] %v1472
      %1893 = vst [vmem:[%s262 + $0x388] sm:$0xff] %v1701
      %1894 = vst [vmem:[%s262 + $0x390] sm:$0xff] %v1474
      %1895 = vst [vmem:[%s262 + $0x398] sm:$0xff] %v1703
      %1896 = vst [vmem:[%s262 + $0x3a0] sm:$0xff] %v1477
      %1897 = vst [vmem:[%s262 + $0x3a8] sm:$0xff] %v1706
      %1898 = vst [vmem:[%s262 + $0x3b0] sm:$0xff] %v1479
      %1899 = vst [vmem:[%s262 + $0x3b8] sm:$0xff] %v1708
      %1900 = vst [vmem:[%s262 + $0x3c0] sm:$0xff] %v1482
      %1901 = vst [vmem:[%s262 + $0x3c8] sm:$0xff] %v1711
      %1902 = vst [vmem:[%s262 + $0x3d0] sm:$0xff] %v1484
      %1903 = vst [vmem:[%s262 + $0x3d8] sm:$0xff] %v1713
      %1904 = vst [vmem:[%s262 + $0x3e0] sm:$0xff] %v1487
      %1905 = vst [vmem:[%s262 + $0x3e8] sm:$0xff] %v1716
      %1906 = vst [vmem:[%s262 + $0x3f0] sm:$0xff] %v1489
      %1907 = vst [vmem:[%s262 + $0x3f8] sm:$0xff] %v1718
      %1908 = vst [vmem:[%s262 + $0x400] sm:$0xff] %v1492
      %1909 = vst [vmem:[%s262 + $0x408] sm:$0xff] %v1721
      %1910 = vst [vmem:[%s262 + $0x410] sm:$0xff] %v1494
      %1911 = vst [vmem:[%s262 + $0x418] sm:$0xff] %v1723
      %1912 = vst [vmem:[%s262 + $0x420] sm:$0xff] %v1497
      %1913 = vst [vmem:[%s262 + $0x428] sm:$0xff] %v1726
      %1914 = vst [vmem:[%s262 + $0x430] sm:$0xff] %v1499
      %1915 = vst [vmem:[%s262 + $0x438] sm:$0xff] %v1728
      %1916 = vst [vmem:[%s262 + $0x440] sm:$0xff] %v1502
      %1917 = vst [vmem:[%s262 + $0x448] sm:$0xff] %v1731
      %1918 = vst [vmem:[%s262 + $0x450] sm:$0xff] %v1504
      %1919 = vst [vmem:[%s262 + $0x458] sm:$0xff] %v1733
      %1920 = vst [vmem:[%s262 + $0x460] sm:$0xff] %v1507
      %1921 = vst [vmem:[%s262 + $0x468] sm:$0xff] %v1736
      %1922 = vst [vmem:[%s262 + $0x470] sm:$0xff] %v1509
      %1923 = vst [vmem:[%s262 + $0x478] sm:$0xff] %v1738
      %1924 = vst [vmem:[%s262 + $0x480] sm:$0xff] %v1512
      %1925 = vst [vmem:[%s262 + $0x488] sm:$0xff] %v1741
      %1926 = vst [vmem:[%s262 + $0x490] sm:$0xff] %v1514
      %1927 = vst [vmem:[%s262 + $0x498] sm:$0xff] %v1743
      %1928 = vst [vmem:[%s262 + $0x4a0] sm:$0xff] %v1517
      %1929 = vst [vmem:[%s262 + $0x4a8] sm:$0xff] %v1746
      %1930 = vst [vmem:[%s262 + $0x4b0] sm:$0xff] %v1519
      %1931 = vst [vmem:[%s262 + $0x4b8] sm:$0xff] %v1748
      %1932 = vst [vmem:[%s262 + $0x4c0] sm:$0xff] %v1522
      %1933 = vst [vmem:[%s262 + $0x4c8] sm:$0xff] %v1751
      %1934 = vst [vmem:[%s262 + $0x4d0] sm:$0xff] %v1524
      %1935 = vst [vmem:[%s262 + $0x4d8] sm:$0xff] %v1753
      %1936 = vst [vmem:[%s262 + $0x4e0] sm:$0xff] %v1527
      %1937 = vst [vmem:[%s262 + $0x4e8] sm:$0xff] %v1756
      %1938 = vst [vmem:[%s262 + $0x4f0] sm:$0xff] %v1529
      %1939 = vst [vmem:[%s262 + $0x4f8] sm:$0xff] %v1758
      %1940 = vst [vmem:[%s262 + $0x500] sm:$0xff] %v1532
      %1941 = vst [vmem:[%s262 + $0x508] sm:$0xff] %v1761
      %1942 = vst [vmem:[%s262 + $0x510] sm:$0xff] %v1534
      %1943 = vst [vmem:[%s262 + $0x518] sm:$0xff] %v1763
      %1944 = vst [vmem:[%s262 + $0x520] sm:$0xff] %v1537
      %1945 = vst [vmem:[%s262 + $0x528] sm:$0xff] %v1766
      %1946 = vst [vmem:[%s262 + $0x530] sm:$0xff] %v1539
      %1947 = vst [vmem:[%s262 + $0x538] sm:$0xff] %v1768
      %1948 = vst [vmem:[%s262 + $0x540] sm:$0xff] %v1542
      %1949 = vst [vmem:[%s262 + $0x548] sm:$0xff] %v1771
      %1950 = vst [vmem:[%s262 + $0x550] sm:$0xff] %v1544
      %1951 = vst [vmem:[%s262 + $0x558] sm:$0xff] %v1773
      %1952 = vst [vmem:[%s262 + $0x560] sm:$0xff] %v1547
      %1953 = vst [vmem:[%s262 + $0x568] sm:$0xff] %v1776
      %1954 = vst [vmem:[%s262 + $0x570] sm:$0xff] %v1549
      %1955 = vst [vmem:[%s262 + $0x578] sm:$0xff] %v1778
      %s1956 = smul.u32 2, %s21
      %p1957 = scmp.lt.s32.totalorder %s20, 1
      %s1958 = scalar_select %p1957, %s20, 1
      %p1959 = scmp.lt.s32.totalorder %s1956, 1
      %s1960 = scalar_select %p1959, %s1956, 1
      %s1961 = smul.addr %s1958, 176
      %s1962 = sadd.s32 %s1960, %s1961
      %s1963 = smul.addr %s1962, 8
      %s1964 = scalar_lea.vmem %s5, %s1963
      // Predicated region
      $region41: #{module1562_forward.3} parent=39 // pred_check
        %p1965 = pneg %p160
      $region42: #{module1562_forward.3} parent=39 // pred_check_branch
        %1967 = sbr.rel (%p1965) target = $region44
      $region43: #{module1562_forward.3} parent=39 // pred_region
        %s1968 = smul.u32 2, %s21
      $region44: #{module1562_forward.3} parent=39 // pred_fallthru
        _
    $region40: #{module1562_forward.3} parent=5 // pred_fallthru
      _
    %p1969 = scmp.le.s32.totalorder 2, %s11
    // Predicated region
    $region45: #{module1562_forward.3} parent=5 // pred_check
      %p1970 = pneg %p1969
    $region46: #{module1562_forward.3} parent=5 // pred_check_branch
      %1972 = sbr.rel (%p1970) target = $region48
    $region47: #{module1562_forward.3} parent=5 // pred_region
      %s1973 = ssub.s32 %s11, 2
      // Predicated region
      $region49: #{module1562_forward.3} parent=47 // pred_check
        %p1974 = pneg %p166
      $region50: #{module1562_forward.3} parent=47 // pred_check_branch
        %1976 = sbr.rel (%p1974) target = $region52
      $region51: #{module1562_forward.3} parent=47 // pred_region
        %s1977 = smul.u32 2, %s23
        %p1978 = scmp.lt.s32.totalorder %s22, 1
        %s1979 = scalar_select %p1978, %s22, 1
        %p1980 = scmp.lt.s32.totalorder %s1977, 1
        %s1981 = scalar_select %p1980, %s1977, 1
        %s1982 = smul.addr %s1979, 176
        %s1983 = sadd.s32 %s1981, %s1982
        %s1984 = smul.addr %s1983, 8
        %s1985 = scalar_lea.vmem %s5, %s1984
      $region52: #{module1562_forward.3} parent=47 // pred_fallthru
        _
    $region48: #{module1562_forward.3} parent=5 // pred_fallthru
      _
  $region6: #{module1562_forward.3} parent=0 // loop_footer
    %s15 = sadd.s32 1, %s11
  $region7: #{module1562_forward.3} parent=0 // loop_footer_branch
    %10 = sbr.rel target = $region3
  $region8: #{module1562_forward.3} parent=0 // loop_exit
    _

</llo_original>
